<compile_context>
chip_gen: v7x
topology: tpu7x:2x2x1
jax: 0.10.0
libtpu: 0.0.40
codegen_flags: <defaults>
</compile_context>

<pallas_src>
from functools import partial

import numpy as np
import jax
import jax.numpy as jnp
from jax.experimental import pallas as pl
from jax.experimental.pallas import tpu as pltpu

# ---------------- cfg.TRAIN constants (standard faster-rcnn.pytorch config) ----
RPN_NEGATIVE_OVERLAP = 0.3
RPN_POSITIVE_OVERLAP = 0.7
RPN_CLOBBER_POSITIVES = False
RPN_FG_FRACTION = 0.5
RPN_BATCHSIZE = 256
RPN_BBOX_INSIDE_WEIGHTS = (1.0, 1.0, 1.0, 1.0)
RPN_POSITIVE_WEIGHT = -1.0

LANE = 128


# ---------------- generate_anchors (numpy, deterministic) ----------------------
def _whctrs(anchor):
    w = anchor[2] - anchor[0] + 1
    h = anchor[3] - anchor[1] + 1
    x_ctr = anchor[0] + 0.5 * (w - 1)
    y_ctr = anchor[1] + 0.5 * (h - 1)
    return w, h, x_ctr, y_ctr


def _mkanchors(ws, hs, x_ctr, y_ctr):
    ws = ws[:, np.newaxis]
    hs = hs[:, np.newaxis]
    return np.hstack((x_ctr - 0.5 * (ws - 1), y_ctr - 0.5 * (hs - 1),
                      x_ctr + 0.5 * (ws - 1), y_ctr + 0.5 * (hs - 1)))


def _ratio_enum(anchor, ratios):
    w, h, x_ctr, y_ctr = _whctrs(anchor)
    size = w * h
    size_ratios = size / ratios
    ws = np.round(np.sqrt(size_ratios))
    hs = np.round(ws * ratios)
    return _mkanchors(ws, hs, x_ctr, y_ctr)


def _scale_enum(anchor, scales):
    w, h, x_ctr, y_ctr = _whctrs(anchor)
    ws = w * scales
    hs = h * scales
    return _mkanchors(ws, hs, x_ctr, y_ctr)


def generate_anchors(base_size=16, ratios=np.array([0.5, 1, 2]),
                     scales=2 ** np.arange(3, 6)):
    base_anchor = np.array([1, 1, base_size, base_size], dtype=np.float64) - 1
    ratio_anchors = _ratio_enum(base_anchor, ratios)
    return np.vstack([_scale_enum(ratio_anchors[i, :], scales)
                      for i in range(ratio_anchors.shape[0])])


# ---------------- in-kernel helper ----------------------------------------------
def _masked_overlaps(imhw_ref, anchors_ref, gt_ref):
    """bbox_overlaps_batch for one anchor tile vs all gt boxes.

    Returns ov_m (G, T) where anchors OUTSIDE the image carry a -2.0 sentinel
    (strictly below any real overlap), plus per-anchor geometry reused later.
    gt_ref block is (1, G, 8) = [x0, y0, x1, y1, area, is_zero, 0, 0].
    """
    ax0 = anchors_ref[0:1, :]          # (1, T)
    ay0 = anchors_ref[1:2, :]
    ax1 = anchors_ref[2:3, :]
    ay1 = anchors_ref[3:4, :]

    # inside-image mask computed in-kernel from SMEM scalars (allowed_border=0).
    im_h = imhw_ref[0]
    im_w = imhw_ref[1]
    inside = (ax0 >= 0.0) & (ay0 >= 0.0) & (ax1 < im_w) & (ay1 < im_h)  # (1, T)

    gt = gt_ref[0]                     # (G, 8)  (per-gt quantities hoisted to XLA)
    gx0 = gt[:, 0:1]                   # (G, 1)
    gy0 = gt[:, 1:2]
    gx1 = gt[:, 2:3]
    gy1 = gt[:, 3:4]
    g_area = gt[:, 4:5]
    gt_zero = gt[:, 5:6] > 0.5

    aw = ax1 - ax0 + 1.0               # (1, T)
    ah = ay1 - ay0 + 1.0
    a_area = aw * ah
    a_zero = (aw == 1.0) & (ah == 1.0)

    iw = jnp.maximum(jnp.minimum(ax1, gx1) - jnp.maximum(ax0, gx0) + 1.0, 0.0)
    ih = jnp.maximum(jnp.minimum(ay1, gy1) - jnp.maximum(ay0, gy0) + 1.0, 0.0)
    inter = iw * ih                    # (G, T)
    # exact division (no approx reciprocal): the 0.3 / 0.7 thresholds and the
    # ov == gt_max equality must not flip under approximation error.
    ov = inter / (a_area + g_area - inter)
    ov = jnp.where(gt_zero, 0.0, ov)
    ov = jnp.where(a_zero, -1.0, ov)
    ov_m = jnp.where(inside, ov, -2.0)  # outside anchors -> sentinel
    return ov_m, inside, ax0, ay0, aw, ah


# ---------------- fused kernel: gt-max reduction (phase 0) + labels/targets ------
def _fused_kernel(imhw_ref, anchors_ref, gt_ref, gtc_ref, out_ref, gtmax_sc):
    phase = pl.program_id(1)
    t = pl.program_id(2)

    ov_m, inside, ax0, ay0, aw, ah = _masked_overlaps(imhw_ref, anchors_ref, gt_ref)

    # ---- phase 0: per-gt max overlap over all anchor tiles (VMEM scratch) ----
    @pl.when((phase == 0) & (t == 0))
    def _():
        gtmax_sc[...] = jnp.full(gtmax_sc.shape, -2.0, gtmax_sc.dtype)

    @pl.when(phase == 0)
    def _():
        gtmax_sc[...] = jnp.maximum(gtmax_sc[...],
                                    jnp.max(ov_m, axis=1, keepdims=True))

    # ---- phase 1: labels (pre-subsampling) + bbox regression targets ----
    @pl.when(phase == 1)
    def _():
        G = ov_m.shape[0]
        # per-anchor max / argmax over gt boxes (sublane reductions)
        max_ov = jnp.max(ov_m, axis=0, keepdims=True)                   # (1, T)
        idx = jax.lax.broadcasted_iota(jnp.int32, ov_m.shape, 0)        # (G, T)
        argmax = jnp.min(jnp.where(ov_m == max_ov, idx, G), axis=0,
                         keepdims=True)                                 # (1, T)

        # gt_max from phase 0: same traced expression / same compilation, so
        # the == comparison below is bit-identical.  A gt box with zero inside
        # anchors keeps the -2.0 sentinel; inside anchors never produce -2.0,
        # so no spurious positives (matches the reference, which would only
        # ever see inside anchors).
        gt_max = gtmax_sc[...]                                          # (G, 1)
        gt_max = jnp.where(gt_max == 0.0, 1e-5, gt_max)
        keep_any = jnp.any(ov_m == gt_max, axis=0, keepdims=True)       # (1, T)

        labels = jnp.full(max_ov.shape, -1.0, dtype=jnp.float32)
        labels = jnp.where(inside & (max_ov < RPN_NEGATIVE_OVERLAP), 0.0, labels)
        labels = jnp.where(inside & keep_any, 1.0, labels)
        labels = jnp.where(inside & (max_ov >= RPN_POSITIVE_OVERLAP), 1.0, labels)

        # gather [g_ctr_x, g_ctr_y, gw, gh] of the argmax gt with one tiny f32
        # MXU matmul: (4, G) @ (G, T) -> (4, T).  Keep f32 (coords up to ~2000
        # are not representable in bf16; the matmul is free on the MXU slot).
        onehot = (idx == argmax).astype(jnp.float32)
        gsel = jnp.dot(gtc_ref[0], onehot, preferred_element_type=jnp.float32)
        g_ctr_x = gsel[0:1, :]
        g_ctr_y = gsel[1:2, :]
        sgw = gsel[2:3, :]
        sgh = gsel[3:4, :]

        ex_ctr_x = ax0 + 0.5 * aw
        ex_ctr_y = ay0 + 0.5 * ah
        dx = (g_ctr_x - ex_ctr_x) / aw
        dy = (g_ctr_y - ex_ctr_y) / ah
        dw = jnp.log(sgw / aw)
        dh = jnp.log(sgh / ah)

        tgt = jnp.where(inside, jnp.concatenate([dx, dy, dw, dh], axis=0), 0.0)
        pad = jnp.zeros((3, labels.shape[1]), jnp.float32)
        # packed lane-dense output block: rows 0-3 targets, row 4 labels.
        out_ref[...] = jnp.concatenate([tgt, labels, pad],
                                       axis=0).reshape(out_ref.shape)


# ---------------- XLA-side helper: k-th largest uint32 score (no sort) -----------
def _kth_largest_threshold(scores, mask, k):
    """Largest uint32 t with count(mask & scores >= t) >= k; 0 if count(mask)<k.

    32-step bitwise binary search (compare + count per step) -- replaces
    sort-based lax.top_k which dominates end-to-end time at realistic N.
    """
    def body(i, thr):
        shift = jnp.uint32(31) - i.astype(jnp.uint32)
        cand = thr | (jnp.uint32(1) << shift)
        cnt = jnp.sum((mask & (scores >= cand)).astype(jnp.int32))
        return jnp.where(cnt >= k, cand, thr)
    return jax.lax.fori_loop(0, 32, body, jnp.uint32(0))


# ---------------- device-side forward (jitted) -----------------------------------
@partial(jax.jit, static_argnames=("H", "W", "A", "N", "tile_n"))
def _forward_device(anchors_t, gt_boxes, im_info, key, *, H, W, A, N, tile_n):
    B, G = gt_boxes.shape[0], gt_boxes.shape[1]
    N_pad = anchors_t.shape[1]
    NT = N_pad // tile_n

    # ---- hoist per-gt derived quantities out of the kernel (cheap, (B,G)) ----
    gt_f = gt_boxes.astype(jnp.float32)
    gx0, gy0 = gt_f[:, :, 0], gt_f[:, :, 1]
    gx1, gy1 = gt_f[:, :, 2], gt_f[:, :, 3]
    gw = gx1 - gx0 + 1.0
    gh = gy1 - gy0 + 1.0
    g_area = gw * gh
    gt_zero = ((gw == 1.0) & (gh == 1.0)).astype(jnp.float32)
    zeros = jnp.zeros_like(gw)
    gt_feat = jnp.stack([gx0, gy0, gx1, gy1, g_area, gt_zero, zeros, zeros],
                        axis=-1)                                   # (B, G, 8)
    gtc = jnp.stack([gx0 + 0.5 * gw, gy0 + 0.5 * gh, gw, gh], axis=1)  # (B, 4, G)

    # NOTE: the reference uses im_info[0] for every batch element (by design).
    im_hw = jnp.stack([jnp.trunc(im_info[0, 0]),
                       jnp.trunc(im_info[0, 1])]).astype(jnp.float32)

    # ---- single fused pallas_call: phase 0 = gt-max reduce, phase 1 = labels ---
    # Output index map uses t*phase so the out block stays constant during the
    # reduction phase (no garbage writebacks, no block revisits).
    out_packed = pl.pallas_call(
        _fused_kernel,
        out_shape=jax.ShapeDtypeStruct((B, 8, N_pad), jnp.float32),
        grid=(B, 2, NT),
        in_specs=[pl.BlockSpec(memory_space=pltpu.MemorySpace.SMEM),
                  pl.BlockSpec((4, tile_n), lambda b, p, t: (0, t)),
                  pl.BlockSpec((1, G, 8), lambda b, p, t: (b, 0, 0)),
                  pl.BlockSpec((1, 4, G), lambda b, p, t: (b, 0, 0))],
        out_specs=pl.BlockSpec((1, 8, tile_n), lambda b, p, t: (b, 0, t * p)),
        scratch_shapes=[pltpu.VMEM((G, 1), jnp.float32)],
        # TODO(synk): on v7x, consider pltpu.CORE_PARALLEL on the batch axis to
        # split work across the 2 TensorCores explicitly.
        compiler_params=pltpu.CompilerParams(
            dimension_semantics=("parallel", "arbitrary", "arbitrary")),
    )(im_hw, anchors_t, gt_feat, gtc)

    targets_t = out_packed[:, 0:4, :N]     # (B, 4, N) -- drop tile padding
    labels_pre = out_packed[:, 4, :N]      # (B, N)

    # ---- random fg/bg subsampling: radix-select thresholds, no sorts ----
    # TODO(synk): exact numpy RNG stream of np.random.permutation is not
    # reproduced (same distribution via uint32 random scores + k-th threshold;
    # ~2^-32 tie probability can give k +/- 1 selections).
    num_fg = int(RPN_FG_FRACTION * RPN_BATCHSIZE)
    k_fg = min(num_fg, N)

    def subsample_one(lab, k):
        kf, kb = jax.random.split(k)
        fg_mask = lab == 1.0
        fg_scores = jax.random.bits(kf, lab.shape, jnp.uint32)
        fg_thr = _kth_largest_threshold(fg_scores, fg_mask, k_fg)
        lab = jnp.where(fg_mask & (fg_scores < fg_thr), -1.0, lab)

        num_bg = RPN_BATCHSIZE - jnp.sum(lab == 1.0)
        bg_mask = lab == 0.0
        bg_scores = jax.random.bits(kb, lab.shape, jnp.uint32)
        bg_thr = _kth_largest_threshold(bg_scores, bg_mask, num_bg)
        lab = jnp.where(bg_mask & (bg_scores < bg_thr), -1.0, lab)
        return lab

    keys = jax.random.split(key, B)
    labels = jax.vmap(subsample_one)(labels_pre, keys)

    # ---- weights ----
    inside_w = jnp.where(labels == 1.0, RPN_BBOX_INSIDE_WEIGHTS[0], 0.0)  # (B, N)
    # NOTE: reference reuses the loop variable `i` (= last batch index) when
    # computing num_examples; reproduce that behaviour.
    num_examples = jnp.sum(labels[B - 1] >= 0).astype(jnp.float32)
    positive_weights = 1.0 / num_examples
    negative_weights = 1.0 / num_examples
    outside_w = jnp.where(labels == 1.0, positive_weights,
                          jnp.where(labels == 0.0, negative_weights, 0.0))

    # ---- final NCHW layout: one 1x-sized transpose per tensor, then a cheap
    #      channel repeat / reshape (no 4x-sized NHWC broadcast intermediates) ----
    labels_out = (labels.reshape(B, H, W, A)
                  .transpose(0, 3, 1, 2)
                  .reshape(B, 1, A * H, W))
    bbox_targets = (targets_t.reshape(B, 4, H, W, A)
                    .transpose(0, 4, 1, 2, 3)
                    .reshape(B, 4 * A, H, W))
    biw = jnp.repeat(inside_w.reshape(B, H, W, A).transpose(0, 3, 1, 2),
                     4, axis=1)
    bow = jnp.repeat(outside_w.reshape(B, H, W, A).transpose(0, 3, 1, 2),
                     4, axis=1)
    return labels_out, bbox_targets, biw, bow


# ---------------- wrapper (numpy glue: shifts, anchor padding, tile pick) --------
def anchor_target_forward(rpn_cls_score, gt_boxes, im_info, num_boxes,
                          feat_stride, anchors_np, subsample_key):
    del num_boxes  # unused by the reference forward pass as well
    H, W = rpn_cls_score.shape[2], rpn_cls_score.shape[3]
    A = anchors_np.shape[0]

    # shifts / all_anchors (plain numpy glue, matches reference exactly)
    shift_x = np.arange(0, W) * feat_stride
    shift_y = np.arange(0, H) * feat_stride
    sx, sy = np.meshgrid(shift_x, shift_y)
    shifts = np.vstack((sx.ravel(), sy.ravel(),
                        sx.ravel(), sy.ravel())).transpose().astype(np.float32)
    K = shifts.shape[0]
    all_anchors = (anchors_np.reshape(1, A, 4).astype(np.float32)
                   + shifts.reshape(K, 1, 4)).reshape(K * A, 4)
    N = K * A

    # Anchor tile size: per-tile compute is tiny, so larger tiles cut the
    # per-grid-step overhead.  Sweep knob {512, 1024, 2048}; v5e stays at 512
    # (single vector-store slot makes vreg spills at large tiles expensive).
    kind = jax.devices()[0].device_kind.lower()
    max_tile = 512 if "v5" in kind else 1024

    n_pad128 = ((N + LANE - 1) // LANE) * LANE
    max_tile = min(max_tile, n_pad128)
    nt = (n_pad128 + max_tile - 1) // max_tile
    tile_n = (((n_pad128 + nt - 1) // nt) + LANE - 1) // LANE * LANE
    N_pad = tile_n * nt

    # padded anchors sit outside the image so they behave exactly like _unmap
    # fill values (label -1, targets 0) and are sliced off afterwards.
    anchors_pad = np.full((N_pad, 4), -1.0, np.float32)
    anchors_pad[:N] = all_anchors
    anchors_t = jnp.asarray(anchors_pad.T)            # (4, N_pad), lane-dense

    return _forward_device(anchors_t, gt_boxes, im_info, subsample_key,
                           H=H, W=W, A=A, N=N, tile_n=tile_n)


# ---------------- demo ------------------------------------------------------------
if __name__ == "__main__":
    key = jax.random.PRNGKey(0)

    feat_stride = 16
    scales = np.array([8, 16, 32])
    ratios = np.array([0.5, 1, 2])
    anchors_np = generate_anchors(scales=scales, ratios=ratios).astype(np.float32)
    A = anchors_np.shape[0]          # 9

    B, H, W = 2, 16, 16              # feature map; image is 256x256
    G = 20

    k0, k1, k2, k3, k4 = jax.random.split(key, 5)
    rpn_cls_score = jax.random.normal(k0, (B, 2 * A, H, W), jnp.float32)

    x0 = jax.random.uniform(k1, (B, G), minval=0.0, maxval=180.0)
    y0 = jax.random.uniform(k2, (B, G), minval=0.0, maxval=180.0)
    bw = jax.random.uniform(k3, (B, G), minval=8.0, maxval=64.0)
    bh = jax.random.uniform(k4, (B, G), minval=8.0, maxval=64.0)
    cls = jnp.ones((B, G), jnp.float32)
    gt = jnp.stack([x0, y0, x0 + bw, y0 + bh, cls], axis=-1)
    valid = (jnp.arange(G) < 12).astype(jnp.float32)[None, :, None]
    gt_boxes = gt * valid            # zero-padded gt boxes, like the real layer

    im_info = jnp.array([[256.0, 256.0, 1.0],
                         [256.0, 256.0, 1.0]], jnp.float32)
    num_boxes = jnp.array([12, 12], jnp.int32)

    outs = anchor_target_forward(rpn_cls_score, gt_boxes, im_info, num_boxes,
                                 feat_stride, anchors_np,
                                 subsample_key=jax.random.PRNGKey(42))
    for o in outs:
        jax.block_until_ready(o)

    assert outs[0].shape == (B, 1, A * H, W)
    assert outs[1].shape == (B, 4 * A, H, W)
    assert outs[2].shape == (B, 4 * A, H, W)
    assert outs[3].shape == (B, 4 * A, H, W)
    assert all(bool(jnp.all(jnp.isfinite(o))) for o in outs)
    print("KERNEL_OK")
</pallas_src>

<mosaic_0001>
module attributes {stable_mosaic.version = 11 : i64} {
  func.func @_fused_kernel(%arg0: i32, %arg1: i32, %arg2: i32, %arg3: memref<2xf32, #tpu.memory_space<smem>>, %arg4: memref<4x768xf32, #tpu.memory_space<vmem>>, %arg5: memref<1x20x8xf32, #tpu.memory_space<vmem>>, %arg6: memref<1x4x20xf32, #tpu.memory_space<vmem>>, %arg7: memref<1x8x768xf32, #tpu.memory_space<vmem>>, %arg8: memref<20x1xf32, #tpu.memory_space<vmem>>) attributes {dimension_semantics = [#tpu.dimension_semantics<parallel>, #tpu.dimension_semantics<arbitrary>, #tpu.dimension_semantics<arbitrary>], iteration_bounds = array<i64: 2, 2, 3>, scalar_prefetch = 0 : i64, scratch_operands = 1 : i64, tpu.core_type = #tpu.core_type<tc>, window_params = [{transform_indices = @transform_0, window_bounds = array<i64: 2>}, {transform_indices = @transform_1, window_bounds = array<i64: 4, 768>}, {transform_indices = @transform_2, window_bounds = array<i64: 1, 20, 8>}, {transform_indices = @transform_3, window_bounds = array<i64: 1, 4, 20>}, {transform_indices = @transform_4, window_bounds = array<i64: 1, 8, 768>}]} {
    %c0 = arith.constant 0 : index
    %c0_0 = arith.constant 0 : index
    %0 = vector.load %arg4[%c0, %c0_0] : memref<4x768xf32, #tpu.memory_space<vmem>>, vector<1x768xf32>
    %c1 = arith.constant 1 : index
    %c0_1 = arith.constant 0 : index
    %1 = vector.load %arg4[%c1, %c0_1] : memref<4x768xf32, #tpu.memory_space<vmem>>, vector<1x768xf32>
    %c2 = arith.constant 2 : index
    %c0_2 = arith.constant 0 : index
    %2 = vector.load %arg4[%c2, %c0_2] : memref<4x768xf32, #tpu.memory_space<vmem>>, vector<1x768xf32>
    %c3 = arith.constant 3 : index
    %c0_3 = arith.constant 0 : index
    %3 = vector.load %arg4[%c3, %c0_3] : memref<4x768xf32, #tpu.memory_space<vmem>>, vector<1x768xf32>
    %c0_4 = arith.constant 0 : index
    %4 = memref.load %arg3[%c0_4] : memref<2xf32, #tpu.memory_space<smem>>
    %c1_5 = arith.constant 1 : index
    %5 = memref.load %arg3[%c1_5] : memref<2xf32, #tpu.memory_space<smem>>
    %cst = arith.constant 0.000000e+00 : f32
    %6 = vector.broadcast %cst : f32 to vector<1x768xf32>
    %7 = arith.cmpf oge, %0, %6 : vector<1x768xf32>
    %cst_6 = arith.constant 0.000000e+00 : f32
    %8 = vector.broadcast %cst_6 : f32 to vector<1x768xf32>
    %9 = arith.cmpf oge, %1, %8 : vector<1x768xf32>
    %10 = arith.andi %7, %9 : vector<1x768xi1>
    %11 = vector.broadcast %5 : f32 to vector<1x768xf32>
    %12 = arith.cmpf olt, %2, %11 : vector<1x768xf32>
    %13 = arith.andi %10, %12 : vector<1x768xi1>
    %14 = vector.broadcast %4 : f32 to vector<1x768xf32>
    %15 = arith.cmpf olt, %3, %14 : vector<1x768xf32>
    %16 = arith.andi %13, %15 : vector<1x768xi1>
    %c0_7 = arith.constant 0 : index
    %c0_8 = arith.constant 0 : index
    %c0_9 = arith.constant 0 : index
    %17 = vector.load %arg5[%c0_7, %c0_8, %c0_9] : memref<1x20x8xf32, #tpu.memory_space<vmem>>, vector<1x20x8xf32>
    %18 = vector.shape_cast %17 : vector<1x20x8xf32> to vector<20x8xf32>
    %19 = vector.extract_strided_slice %18 {offsets = [0, 0], sizes = [20, 1], strides = [1, 1]} : vector<20x8xf32> to vector<20x1xf32>
    %20 = vector.extract_strided_slice %18 {offsets = [0, 1], sizes = [20, 1], strides = [1, 1]} : vector<20x8xf32> to vector<20x1xf32>
    %21 = vector.extract_strided_slice %18 {offsets = [0, 2], sizes = [20, 1], strides = [1, 1]} : vector<20x8xf32> to vector<20x1xf32>
    %22 = vector.extract_strided_slice %18 {offsets = [0, 3], sizes = [20, 1], strides = [1, 1]} : vector<20x8xf32> to vector<20x1xf32>
    %23 = vector.extract_strided_slice %18 {offsets = [0, 4], sizes = [20, 1], strides = [1, 1]} : vector<20x8xf32> to vector<20x1xf32>
    %24 = vector.extract_strided_slice %18 {offsets = [0, 5], sizes = [20, 1], strides = [1, 1]} : vector<20x8xf32> to vector<20x1xf32>
    %cst_10 = arith.constant 5.000000e-01 : f32
    %25 = vector.broadcast %cst_10 : f32 to vector<20x1xf32>
    %26 = arith.cmpf ogt, %24, %25 : vector<20x1xf32>
    %27 = arith.subf %2, %0 : vector<1x768xf32>
    %cst_11 = arith.constant 1.000000e+00 : f32
    %28 = vector.broadcast %cst_11 : f32 to vector<1x768xf32>
    %29 = arith.addf %27, %28 : vector<1x768xf32>
    %30 = arith.subf %3, %1 : vector<1x768xf32>
    %cst_12 = arith.constant 1.000000e+00 : f32
    %31 = vector.broadcast %cst_12 : f32 to vector<1x768xf32>
    %32 = arith.addf %30, %31 : vector<1x768xf32>
    %33 = arith.mulf %29, %32 : vector<1x768xf32>
    %cst_13 = arith.constant 1.000000e+00 : f32
    %34 = vector.broadcast %cst_13 : f32 to vector<1x768xf32>
    %35 = arith.cmpf oeq, %29, %34 : vector<1x768xf32>
    %cst_14 = arith.constant 1.000000e+00 : f32
    %36 = vector.broadcast %cst_14 : f32 to vector<1x768xf32>
    %37 = arith.cmpf oeq, %32, %36 : vector<1x768xf32>
    %38 = arith.andi %35, %37 : vector<1x768xi1>
    %39 = vector.broadcast %2 : vector<1x768xf32> to vector<20x768xf32>
    %40 = vector.broadcast %21 : vector<20x1xf32> to vector<20x768xf32>
    %41 = arith.minimumf %39, %40 : vector<20x768xf32>
    %42 = vector.broadcast %0 : vector<1x768xf32> to vector<20x768xf32>
    %43 = vector.broadcast %19 : vector<20x1xf32> to vector<20x768xf32>
    %44 = arith.maximumf %42, %43 : vector<20x768xf32>
    %45 = arith.subf %41, %44 : vector<20x768xf32>
    %cst_15 = arith.constant 1.000000e+00 : f32
    %46 = vector.broadcast %cst_15 : f32 to vector<20x768xf32>
    %47 = arith.addf %45, %46 : vector<20x768xf32>
    %cst_16 = arith.constant 0.000000e+00 : f32
    %48 = vector.broadcast %cst_16 : f32 to vector<20x768xf32>
    %49 = arith.maximumf %47, %48 : vector<20x768xf32>
    %50 = vector.broadcast %3 : vector<1x768xf32> to vector<20x768xf32>
    %51 = vector.broadcast %22 : vector<20x1xf32> to vector<20x768xf32>
    %52 = arith.minimumf %50, %51 : vector<20x768xf32>
    %53 = vector.broadcast %1 : vector<1x768xf32> to vector<20x768xf32>
    %54 = vector.broadcast %20 : vector<20x1xf32> to vector<20x768xf32>
    %55 = arith.maximumf %53, %54 : vector<20x768xf32>
    %56 = arith.subf %52, %55 : vector<20x768xf32>
    %cst_17 = arith.constant 1.000000e+00 : f32
    %57 = vector.broadcast %cst_17 : f32 to vector<20x768xf32>
    %58 = arith.addf %56, %57 : vector<20x768xf32>
    %cst_18 = arith.constant 0.000000e+00 : f32
    %59 = vector.broadcast %cst_18 : f32 to vector<20x768xf32>
    %60 = arith.maximumf %58, %59 : vector<20x768xf32>
    %61 = arith.mulf %49, %60 : vector<20x768xf32>
    %62 = vector.broadcast %33 : vector<1x768xf32> to vector<20x768xf32>
    %63 = vector.broadcast %23 : vector<20x1xf32> to vector<20x768xf32>
    %64 = arith.addf %62, %63 : vector<20x768xf32>
    %65 = arith.subf %64, %61 : vector<20x768xf32>
    %66 = arith.divf %61, %65 : vector<20x768xf32>
    %cst_19 = arith.constant 0.000000e+00 : f32
    %67 = vector.shape_cast %26 : vector<20x1xi1> to vector<20x1xi1>
    %68 = vector.broadcast %67 : vector<20x1xi1> to vector<20x768xi1>
    %69 = vector.broadcast %cst_19 : f32 to vector<20x768xf32>
    %70 = arith.select %68, %69, %66 : vector<20x768xi1>, vector<20x768xf32>
    %cst_20 = arith.constant -1.000000e+00 : f32
    %71 = vector.shape_cast %38 : vector<1x768xi1> to vector<1x768xi1>
    %72 = vector.broadcast %71 : vector<1x768xi1> to vector<20x768xi1>
    %73 = vector.broadcast %cst_20 : f32 to vector<20x768xf32>
    %74 = arith.select %72, %73, %70 : vector<20x768xi1>, vector<20x768xf32>
    %cst_21 = arith.constant -2.000000e+00 : f32
    %75 = vector.shape_cast %16 : vector<1x768xi1> to vector<1x768xi1>
    %76 = vector.broadcast %75 : vector<1x768xi1> to vector<20x768xi1>
    %77 = vector.broadcast %cst_21 : f32 to vector<20x768xf32>
    %78 = arith.select %76, %74, %77 : vector<20x768xi1>, vector<20x768xf32>
    %c0_i32 = arith.constant 0 : i32
    %79 = arith.cmpi eq, %arg1, %c0_i32 : i32
    %c0_i32_22 = arith.constant 0 : i32
    %80 = arith.cmpi eq, %arg2, %c0_i32_22 : i32
    %81 = arith.andi %79, %80 : i1
    %82 = arith.extui %81 : i1 to i32
    %c0_i32_23 = arith.constant 0 : i32
    %83 = arith.cmpi ne, %82, %c0_i32_23 : i32
    scf.if %83 {
      %cst_27 = arith.constant -2.000000e+00 : f32
      %90 = vector.broadcast %cst_27 : f32 to vector<20x1xf32>
      %c0_28 = arith.constant 0 : index
      %c0_29 = arith.constant 0 : index
      %91 = vector.load %arg8[%c0_28, %c0_29] : memref<20x1xf32, #tpu.memory_space<vmem>>, vector<20x1xf32>
      tpu.vector_store %arg8[%c0_28, %c0_29], %90 {strides = array<i32>} : memref<20x1xf32, #tpu.memory_space<vmem>>, vector<20x1xf32>,
    } else {
    }
    %c0_i32_24 = arith.constant 0 : i32
    %84 = arith.cmpi eq, %arg1, %c0_i32_24 : i32
    %85 = arith.extui %84 : i1 to i32
    %c0_i32_25 = arith.constant 0 : i32
    %86 = arith.cmpi ne, %85, %c0_i32_25 : i32
    scf.if %86 {
      %c0_27 = arith.constant 0 : index
      %c0_28 = arith.constant 0 : index
      %90 = vector.load %arg8[%c0_27, %c0_28] : memref<20x1xf32, #tpu.memory_space<vmem>>, vector<20x1xf32>
      %cst_29 = arith.constant dense<0xFF800000> : vector<20xf32>
      %91 = vector.multi_reduction <maximumf>, %78, %cst_29 [1] : vector<20x768xf32> to vector<20xf32>
      %92 = vector.shape_cast %91 : vector<20xf32> to vector<20x1xf32>
      %93 = arith.maximumf %90, %92 : vector<20x1xf32>
      %c0_30 = arith.constant 0 : index
      %c0_31 = arith.constant 0 : index
      %94 = vector.load %arg8[%c0_30, %c0_31] : memref<20x1xf32, #tpu.memory_space<vmem>>, vector<20x1xf32>
      tpu.vector_store %arg8[%c0_30, %c0_31], %93 {strides = array<i32>} : memref<20x1xf32, #tpu.memory_space<vmem>>, vector<20x1xf32>,
    } else {
    }
    %c1_i32 = arith.constant 1 : i32
    %87 = arith.cmpi eq, %arg1, %c1_i32 : i32
    %88 = arith.extui %87 : i1 to i32
    %c0_i32_26 = arith.constant 0 : i32
    %89 = arith.cmpi ne, %88, %c0_i32_26 : i32
    scf.if %89 {
      %cst_27 = arith.constant dense<0xFF800000> : vector<768xf32>
      %90 = vector.multi_reduction <maximumf>, %78, %cst_27 [0] : vector<20x768xf32> to vector<768xf32>
      %91 = vector.shape_cast %90 : vector<768xf32> to vector<1x768xf32>
      %92 = tpu.iota {dimensions = array<i32: 0>} : vector<20x768xi32>
      %93 = vector.broadcast %91 : vector<1x768xf32> to vector<20x768xf32>
      %94 = arith.cmpf oeq, %78, %93 : vector<20x768xf32>
      %c20_i32 = arith.constant 20 : i32
      %95 = vector.broadcast %c20_i32 : i32 to vector<20x768xi32>
      %96 = arith.select %94, %92, %95 : vector<20x768xi1>, vector<20x768xi32>
      %cst_28 = arith.constant dense<2147483647> : vector<768xi32>
      %97 = vector.multi_reduction <minsi>, %96, %cst_28 [0] : vector<20x768xi32> to vector<768xi32>
      %98 = vector.shape_cast %97 : vector<768xi32> to vector<1x768xi32>
      %c0_29 = arith.constant 0 : index
      %c0_30 = arith.constant 0 : index
      %99 = vector.load %arg8[%c0_29, %c0_30] : memref<20x1xf32, #tpu.memory_space<vmem>>, vector<20x1xf32>
      %cst_31 = arith.constant 0.000000e+00 : f32
      %100 = vector.broadcast %cst_31 : f32 to vector<20x1xf32>
      %101 = arith.cmpf oeq, %99, %100 : vector<20x1xf32>
      %cst_32 = arith.constant 9.99999974E-6 : f32
      %102 = vector.broadcast %cst_32 : f32 to vector<20x1xf32>
      %103 = arith.select %101, %102, %99 : vector<20x1xi1>, vector<20x1xf32>
      %104 = vector.broadcast %103 : vector<20x1xf32> to vector<20x768xf32>
      %105 = arith.cmpf oeq, %78, %104 : vector<20x768xf32>
      %cst_33 = arith.constant 1.000000e+00 : f32
      %cst_34 = arith.constant 0.000000e+00 : f32
      %106 = vector.broadcast %cst_33 : f32 to vector<20x768xf32>
      %107 = vector.broadcast %cst_34 : f32 to vector<20x768xf32>
      %108 = arith.select %105, %106, %107 : vector<20x768xi1>, vector<20x768xf32>
      %cst_35 = arith.constant dense<0xFF800000> : vector<768xf32>
      %109 = vector.multi_reduction <maximumf>, %108, %cst_35 [0] : vector<20x768xf32> to vector<768xf32>
      %cst_36 = arith.constant 0.000000e+00 : f32
      %110 = vector.broadcast %cst_36 : f32 to vector<768xf32>
      %111 = arith.cmpf ogt, %109, %110 : vector<768xf32>
      %112 = vector.shape_cast %111 : vector<768xi1> to vector<1x768xi1>
      %cst_37 = arith.constant -1.000000e+00 : f32
      %113 = vector.broadcast %cst_37 : f32 to vector<1x768xf32>
      %cst_38 = arith.constant 3.000000e-01 : f32
      %114 = vector.broadcast %cst_38 : f32 to vector<1x768xf32>
      %115 = arith.cmpf olt, %91, %114 : vector<1x768xf32>
      %116 = arith.andi %16, %115 : vector<1x768xi1>
      %cst_39 = arith.constant 0.000000e+00 : f32
      %117 = vector.broadcast %cst_39 : f32 to vector<1x768xf32>
      %118 = arith.select %116, %117, %113 : vector<1x768xi1>, vector<1x768xf32>
      %119 = arith.andi %16, %112 : vector<1x768xi1>
      %cst_40 = arith.constant 1.000000e+00 : f32
      %120 = vector.broadcast %cst_40 : f32 to vector<1x768xf32>
      %121 = arith.select %119, %120, %118 : vector<1x768xi1>, vector<1x768xf32>
      %cst_41 = arith.constant 0.699999988 : f32
      %122 = vector.broadcast %cst_41 : f32 to vector<1x768xf32>
      %123 = arith.cmpf oge, %91, %122 : vector<1x768xf32>
      %124 = arith.andi %16, %123 : vector<1x768xi1>
      %cst_42 = arith.constant 1.000000e+00 : f32
      %125 = vector.broadcast %cst_42 : f32 to vector<1x768xf32>
      %126 = arith.select %124, %125, %121 : vector<1x768xi1>, vector<1x768xf32>
      %127 = vector.broadcast %98 : vector<1x768xi32> to vector<20x768xi32>
      %128 = arith.cmpi eq, %92, %127 : vector<20x768xi32>
      %129 = arith.extui %128 : vector<20x768xi1> to vector<20x768xi32>
      %130 = arith.sitofp %129 : vector<20x768xi32> to vector<20x768xf32>
      %c0_43 = arith.constant 0 : index
      %c0_44 = arith.constant 0 : index
      %c0_45 = arith.constant 0 : index
      %131 = vector.load %arg6[%c0_43, %c0_44, %c0_45] : memref<1x4x20xf32, #tpu.memory_space<vmem>>, vector<1x4x20xf32>
      %132 = vector.shape_cast %131 : vector<1x4x20xf32> to vector<4x20xf32>
      %cst_46 = arith.constant dense<0.000000e+00> : vector<4x768xf32>
      %133 = tpu.matmul %132, %130, %cst_46 {dimension_numbers = #tpu.dot_dimension_numbers<[1], [0], [0], [1], [0, 0, 1, 1], [], []>} : vector<4x20xf32>, vector<20x768xf32>, vector<4x768xf32> -> vector<4x768xf32>
      %134 = vector.extract_strided_slice %133 {offsets = [0, 0], sizes = [1, 768], strides = [1, 1]} : vector<4x768xf32> to vector<1x768xf32>
      %135 = vector.extract_strided_slice %133 {offsets = [1, 0], sizes = [1, 768], strides = [1, 1]} : vector<4x768xf32> to vector<1x768xf32>
      %136 = vector.extract_strided_slice %133 {offsets = [2, 0], sizes = [1, 768], strides = [1, 1]} : vector<4x768xf32> to vector<1x768xf32>
      %137 = vector.extract_strided_slice %133 {offsets = [3, 0], sizes = [1, 768], strides = [1, 1]} : vector<4x768xf32> to vector<1x768xf32>
      %cst_47 = arith.constant 5.000000e-01 : f32
      %138 = vector.broadcast %cst_47 : f32 to vector<1x768xf32>
      %139 = arith.mulf %138, %29 : vector<1x768xf32>
      %140 = arith.addf %0, %139 : vector<1x768xf32>
      %cst_48 = arith.constant 5.000000e-01 : f32
      %141 = vector.broadcast %cst_48 : f32 to vector<1x768xf32>
      %142 = arith.mulf %141, %32 : vector<1x768xf32>
      %143 = arith.addf %1, %142 : vector<1x768xf32>
      %144 = arith.subf %134, %140 : vector<1x768xf32>
      %145 = arith.divf %144, %29 : vector<1x768xf32>
      %146 = arith.subf %135, %143 : vector<1x768xf32>
      %147 = arith.divf %146, %32 : vector<1x768xf32>
      %148 = arith.divf %136, %29 : vector<1x768xf32>
      %149 = math.log %148 : vector<1x768xf32>
      %150 = arith.divf %137, %32 : vector<1x768xf32>
      %151 = math.log %150 : vector<1x768xf32>
      %152 = tpu.concatenate %145, %147, %149, %151 in 0 : vector<1x768xf32>, vector<1x768xf32>, vector<1x768xf32>, vector<1x768xf32> -> vector<4x768xf32>
      %cst_49 = arith.constant 0.000000e+00 : f32
      %153 = vector.shape_cast %16 : vector<1x768xi1> to vector<1x768xi1>
      %154 = vector.broadcast %153 : vector<1x768xi1> to vector<4x768xi1>
      %155 = vector.broadcast %cst_49 : f32 to vector<4x768xf32>
      %156 = arith.select %154, %152, %155 : vector<4x768xi1>, vector<4x768xf32>
      %cst_50 = arith.constant 0.000000e+00 : f32
      %157 = vector.broadcast %cst_50 : f32 to vector<3x768xf32>
      %158 = tpu.concatenate %156, %126, %157 in 0 : vector<4x768xf32>, vector<1x768xf32>, vector<3x768xf32> -> vector<8x768xf32>
      %159 = vector.shape_cast %158 : vector<8x768xf32> to vector<1x8x768xf32>
      %c0_51 = arith.constant 0 : index
      %c0_52 = arith.constant 0 : index
      %c0_53 = arith.constant 0 : index
      %160 = vector.load %arg7[%c0_51, %c0_52, %c0_53] : memref<1x8x768xf32, #tpu.memory_space<vmem>>, vector<1x8x768xf32>
      tpu.vector_store %arg7[%c0_51, %c0_52, %c0_53], %159 {strides = array<i32>} : memref<1x8x768xf32, #tpu.memory_space<vmem>>, vector<1x8x768xf32>,
    } else {
    }
    return
  }
  func.func @transform_0(%arg0: i32, %arg1: i32, %arg2: i32) -> i32 {
    %c0_i32 = arith.constant 0 : i32
    %c0_i32_0 = arith.constant 0 : i32
    return %c0_i32 : i32
  }
  func.func @transform_1(%arg0: i32, %arg1: i32, %arg2: i32) -> (i32, i32) {
    %c0_i32 = arith.constant 0 : i32
    %c0_i32_0 = arith.constant 0 : i32
    return %c0_i32, %arg2 : i32, i32
  }
  func.func @transform_2(%arg0: i32, %arg1: i32, %arg2: i32) -> (i32, i32, i32) {
    %c0_i32 = arith.constant 0 : i32
    %c0_i32_0 = arith.constant 0 : i32
    %c0_i32_1 = arith.constant 0 : i32
    return %arg0, %c0_i32, %c0_i32_0 : i32, i32, i32
  }
  func.func @transform_3(%arg0: i32, %arg1: i32, %arg2: i32) -> (i32, i32, i32) {
    %c0_i32 = arith.constant 0 : i32
    %c0_i32_0 = arith.constant 0 : i32
    %c0_i32_1 = arith.constant 0 : i32
    return %arg0, %c0_i32, %c0_i32_0 : i32, i32, i32
  }
  func.func @transform_4(%arg0: i32, %arg1: i32, %arg2: i32) -> (i32, i32, i32) {
    %0 = arith.muli %arg2, %arg1 : i32
    %c0_i32 = arith.constant 0 : i32
    %c0_i32_0 = arith.constant 0 : i32
    return %arg0, %c0_i32, %0 : i32, i32, i32
  }
}

</mosaic_0001>

<llo_original>
// kernel: custom-call
$region0: #{custom-call}
  %s0 = inlined_call_operand.vmem [shape: u32[2], index: 0, kind: output, shape index: {}]

// kernel: _forward_device.5
$region0: #{_forward_device.5}
  #allocation0 [shape = 'u32[]', space=smem, size = 0x4, offset = 0x4, fixed_abs, tag = 'smem constant byte address 0x4 - core index']
  #allocation1 [shape = 'u32[144,128]{1,0:T(1,128)}', space=vmem, size = 0x12000, scoped, tag = 'internal scratch']
  #allocation2 [shape = 'f32[20,1]{1,0:T(8,128)}', space=vmem, size = 0x3000, scoped, tag = 'scratch operand']
  %s0 = inlined_call_operand.vmem [shape: f32[2], index: 0, kind: input, shape index: {}]
  %s1 = inlined_call_operand.vmem [shape: f32[4,2304], index: 1, kind: input, shape index: {}]
  %s2 = inlined_call_operand.vmem [shape: f32[2,20,8], index: 2, kind: input, shape index: {}]
  %s3 = inlined_call_operand.vmem [shape: f32[2,4,20], index: 3, kind: input, shape index: {}]
  %s4 = inlined_call_operand.vmem [shape: f32[2,8,2304], index: 4, kind: output, shape index: {}]
  %s5 = sld [smem:[#allocation0]]
  $region65: #{_forward_device.5} parent=0
    _
  %s7 = ssub.s32 1, %s5
  %s8 = scalar_select 0, %s7, %s5
  $region1: #{_forward_device.5} parent=0
    #allocation3 [shape = 'u8[512]{0}', space=smem, size = 0x200, scoped, tag = 'input window, operand 0, single buffered']
    #allocation4 [shape = 's32[2]{0}', space=sflag, size = 0x8, scoped, tag = 'scoped memory for _forward_device.5']
    %9 = vsyncpa [#allocation4], 0
    loop: start=0, step=1, limit=14
    $region2: #{_forward_device.5} parent=1 // loop_pre_header
      _
    $region3: #{_forward_device.5} parent=1 // loop_header
      %s11 = sphi 0, %s15
      %p12 = scmp.ge.s32.totalorder %s11, 14
      %s18 = sphi 0, %s37
      %s19 = sphi 0, %s33
      %s20 = sphi 0, %s29
      %s21 = sphi 0, %s18
      %s22 = sphi 0, %s19
      %s23 = sphi 0, %s20
      %s24 = sphi 0, %s21
      %s25 = sphi 0, %s22
      %s26 = sphi 0, %s23
      %s38 = sphi 0, %s38
      %s40 = sphi 0, %s38
      %s41 = sphi 0, %s40
      %s55 = sphi 0, %s41
      %s61 = sphi 0, %s63
      %s64 = sphi 0, %s61
      %s65 = sphi 0, %s64
      %s81 = sphi 0, %s65
      %s87 = sphi 0, %s89
      %s90 = sphi 0, %s87
      %s91 = sphi 0, %s90
      %s107 = sphi 0, %s91
      %s113 = sphi 0, %s115
      %s116 = sphi 0, %s113
      %s117 = sphi 0, %s116
      %s133 = sphi 0, %s117
      %s143 = sphi 0, %s145
      %s146 = sphi 0, %s143
      %s147 = sphi 0, %s146
      %s163 = sphi 0, %s147
    $region4: #{_forward_device.5} parent=1 // loop_header_branch
      %14 = sbr.rel (%p12) target = $region8
    $region5: #{_forward_device.5} parent=1 // loop_body
      %s16 = ssub.s32 %s11, 1
      %s17 = ssub.s32 %s11, 2
      %s27 = sadd.s32 1, %s20
      %p28 = scmp.ge.s32.totalorder %s27, 3
      %s29 = scalar_select %p28, 0, %s27
      %s30 = sadd.s32 1, %s19
      %s31 = scalar_select %p28, %s30, %s19
      %p32 = scmp.ge.s32.totalorder %s31, 2
      %s33 = scalar_select %p32, 0, %s31
      %s34 = sadd.s32 1, %s18
      %s35 = scalar_select %p32, %s34, %s18
      %p36 = scmp.ge.s32.totalorder %s35, 2
      %s37 = scalar_select %p36, 0, %s35
      %s39 = sadd.s32 %s38, 1
      %p42 = scmp.eq.s32.totalorder %s11, 11
      %p43 = scmp.ne.s32.totalorder %s38, %s40
      %p44 = scmp.eq.s32.totalorder %s11, 0
      %p45 = por %p43, %p44
      %p46 = scmp.ne.s32.totalorder %s38, %s40
      %p47 = scmp.eq.s32.totalorder %s16, 11
      %p48 = por %p46, %p47
      %p49 = scmp.ne.s32.totalorder %s40, %s41
      %p50 = scmp.eq.s32.totalorder %s16, 0
      %p51 = por %p49, %p50
      %p52 = scmp.ne.s32.totalorder %s40, %s41
      %p53 = scmp.eq.s32.totalorder %s17, 11
      %p54 = por %p52, %p53
      %p56 = scmp.ne.s32.totalorder %s41, %s55
      %p57 = scmp.eq.s32.totalorder %s17, 0
      %p58 = por %p56, %p57
      %s59 = ssub.s32 %s20, %s29
      %p60 = scmp.eq.s32.totalorder %s59, 0
      %s62 = sadd.s32 %s61, 1
      %s63 = scalar_select %p60, %s61, %s62
      %p66 = pneg %p60
      %p67 = scmp.eq.s32.totalorder %s11, 11
      %p68 = por %p66, %p67
      %p69 = scmp.ne.s32.totalorder %s61, %s64
      %p70 = scmp.eq.s32.totalorder %s11, 0
      %p71 = por %p69, %p70
      %p72 = scmp.ne.s32.totalorder %s61, %s64
      %p73 = scmp.eq.s32.totalorder %s16, 11
      %p74 = por %p72, %p73
      %p75 = scmp.ne.s32.totalorder %s64, %s65
      %p76 = scmp.eq.s32.totalorder %s16, 0
      %p77 = por %p75, %p76
      %p78 = scmp.ne.s32.totalorder %s64, %s65
      %p79 = scmp.eq.s32.totalorder %s17, 11
      %p80 = por %p78, %p79
      %p82 = scmp.ne.s32.totalorder %s65, %s81
      %p83 = scmp.eq.s32.totalorder %s17, 0
      %p84 = por %p82, %p83
      %s85 = ssub.s32 %s18, %s37
      %p86 = scmp.eq.s32.totalorder %s85, 0
      %s88 = sadd.s32 %s87, 1
      %s89 = scalar_select %p86, %s87, %s88
      %p92 = pneg %p86
      %p93 = scmp.eq.s32.totalorder %s11, 11
      %p94 = por %p92, %p93
      %p95 = scmp.ne.s32.totalorder %s87, %s90
      %p96 = scmp.eq.s32.totalorder %s11, 0
      %p97 = por %p95, %p96
      %p98 = scmp.ne.s32.totalorder %s87, %s90
      %p99 = scmp.eq.s32.totalorder %s16, 11
      %p100 = por %p98, %p99
      %p101 = scmp.ne.s32.totalorder %s90, %s91
      %p102 = scmp.eq.s32.totalorder %s16, 0
      %p103 = por %p101, %p102
      %p104 = scmp.ne.s32.totalorder %s90, %s91
      %p105 = scmp.eq.s32.totalorder %s17, 11
      %p106 = por %p104, %p105
      %p108 = scmp.ne.s32.totalorder %s91, %s107
      %p109 = scmp.eq.s32.totalorder %s17, 0
      %p110 = por %p108, %p109
      %s111 = ssub.s32 %s18, %s37
      %p112 = scmp.eq.s32.totalorder %s111, 0
      %s114 = sadd.s32 %s113, 1
      %s115 = scalar_select %p112, %s113, %s114
      %p118 = pneg %p112
      %p119 = scmp.eq.s32.totalorder %s11, 11
      %p120 = por %p118, %p119
      %p121 = scmp.ne.s32.totalorder %s113, %s116
      %p122 = scmp.eq.s32.totalorder %s11, 0
      %p123 = por %p121, %p122
      %p124 = scmp.ne.s32.totalorder %s113, %s116
      %p125 = scmp.eq.s32.totalorder %s16, 11
      %p126 = por %p124, %p125
      %p127 = scmp.ne.s32.totalorder %s116, %s117
      %p128 = scmp.eq.s32.totalorder %s16, 0
      %p129 = por %p127, %p128
      %p130 = scmp.ne.s32.totalorder %s116, %s117
      %p131 = scmp.eq.s32.totalorder %s17, 11
      %p132 = por %p130, %p131
      %p134 = scmp.ne.s32.totalorder %s117, %s133
      %p135 = scmp.eq.s32.totalorder %s17, 0
      %p136 = por %p134, %p135
      %s137 = smul.u32 %s20, %s19
      %s138 = smul.u32 %s29, %s33
      %s139 = ssub.s32 %s18, %s37
      %s140 = ssub.s32 %s137, %s138
      %s141 = sor.u32 %s139, %s140
      %p142 = scmp.eq.s32.totalorder %s141, 0
      %s144 = sadd.s32 %s143, 1
      %s145 = scalar_select %p142, %s143, %s144
      %p148 = pneg %p142
      %p149 = scmp.eq.s32.totalorder %s11, 11
      %p150 = por %p148, %p149
      %p151 = scmp.ne.s32.totalorder %s143, %s146
      %p152 = scmp.eq.s32.totalorder %s11, 0
      %p153 = por %p151, %p152
      %p154 = scmp.ne.s32.totalorder %s143, %s146
      %p155 = scmp.eq.s32.totalorder %s16, 11
      %p156 = por %p154, %p155
      %p157 = scmp.ne.s32.totalorder %s146, %s147
      %p158 = scmp.eq.s32.totalorder %s16, 0
      %p159 = por %p157, %p158
      %p160 = scmp.ne.s32.totalorder %s146, %s147
      %p161 = scmp.eq.s32.totalorder %s17, 11
      %p162 = por %p160, %p161
      %p164 = scmp.ne.s32.totalorder %s147, %s163
      %p165 = scmp.eq.s32.totalorder %s17, 0
      %p166 = por %p164, %p165
      %p167 = scmp.le.s32.totalorder 1, %s11
      %p168 = scmp.lt.s32.totalorder %s11, 13
      %p169 = pnand %p167, %p168
      %p170 = pneg %p169
      // Predicated region
      $region9: #{_forward_device.5} parent=5 // pred_check
        _
      $region10: #{_forward_device.5} parent=5 // pred_check_branch
        %172 = sbr.rel (%p169) target = $region12
      $region11: #{_forward_device.5} parent=5 // pred_region
        %s173 = ssub.s32 %s11, 1
        // Predicated region
        $region13: #{_forward_device.5} parent=11 // pred_check
          %p174 = pneg %p51
        $region14: #{_forward_device.5} parent=11 // pred_check_branch
          %176 = sbr.rel (%p174) target = $region16
        $region15: #{_forward_device.5} parent=11 // pred_region
          %s178 = ssub.s32 16, 16
          %179 = vsyncadd [#allocation4], %s178
          %s181 = sshll.u32 %s0, 4
          %s182 = int_to_ptr.vmem [resolvable:$true] %s181
          %184 = dma.vmem_to_smem %s182, 16, [#allocation3], [#allocation4]
        $region16: #{_forward_device.5} parent=11 // pred_fallthru
          _
      $region12: #{_forward_device.5} parent=5 // pred_fallthru
        _
      %p185 = scmp.lt.s32.totalorder %s11, 12
      // Predicated region
      $region17: #{_forward_device.5} parent=5 // pred_check
        %p186 = pneg %p185
      $region18: #{_forward_device.5} parent=5 // pred_check_branch
        %188 = sbr.rel (%p186) target = $region20
      $region19: #{_forward_device.5} parent=5 // pred_region
        // Predicated region
        $region21: #{_forward_device.5} parent=19 // pred_check
          %p189 = pneg %p71
        $region22: #{_forward_device.5} parent=19 // pred_check_branch
          %191 = sbr.rel (%p189) target = $region24
        $region23: #{_forward_device.5} parent=19 // pred_region
          %s192 = smul.u32 6, %s20
          %p193 = scmp.lt.s32.totalorder %s192, 17
          %s194 = scalar_select %p193, %s192, 17
          %s195 = smul.addr %s194, 4
          %s196 = scalar_lea.vmem %s1, %s195
          %s197 = smul.u32 6, %s20
        $region24: #{_forward_device.5} parent=19 // pred_fallthru
          _
        // Predicated region
        $region25: #{_forward_device.5} parent=19 // pred_check
          %p198 = pneg %p97
        $region26: #{_forward_device.5} parent=19 // pred_check_branch
          %200 = sbr.rel (%p198) target = $region28
        $region27: #{_forward_device.5} parent=19 // pred_region
          %p201 = scmp.lt.s32.totalorder %s18, 1
          %s202 = scalar_select %p201, %s18, 1
          %s203 = smul.addr %s202, 3
          %s204 = smul.addr %s203, 8
          %s205 = scalar_lea.vmem %s2, %s204
        $region28: #{_forward_device.5} parent=19 // pred_fallthru
          _
        // Predicated region
        $region29: #{_forward_device.5} parent=19 // pred_check
          %p206 = pneg %p123
        $region30: #{_forward_device.5} parent=19 // pred_check_branch
          %208 = sbr.rel (%p206) target = $region32
        $region31: #{_forward_device.5} parent=19 // pred_region
          %p209 = scmp.lt.s32.totalorder %s18, 1
          %s210 = scalar_select %p209, %s18, 1
          %s211 = smul.addr %s210, 4
          %s212 = scalar_lea.vmem %s3, %s211
        $region32: #{_forward_device.5} parent=19 // pred_fallthru
          _
      $region20: #{_forward_device.5} parent=5 // pred_fallthru
        _
      %p213 = scmp.le.s32.totalorder 1, %s11
      %p214 = scmp.lt.s32.totalorder %s11, 13
      %p215 = pnand %p213, %p214
      %p216 = pneg %p215
      // Predicated region
      $region33: #{_forward_device.5} parent=5 // pred_check
        _
      $region34: #{_forward_device.5} parent=5 // pred_check_branch
        %218 = sbr.rel (%p215) target = $region36
      $region35: #{_forward_device.5} parent=5 // pred_region
        %s219 = ssub.s32 %s11, 1
        // Predicated region
        $region37: #{_forward_device.5} parent=35 // pred_check
          %p220 = pneg %p51
        $region38: #{_forward_device.5} parent=35 // pred_check_branch
          %222 = sbr.rel (%p220) target = $region40
        $region39: #{_forward_device.5} parent=35 // pred_region
          %223 = dma.done [#allocation4], 16
        $region40: #{_forward_device.5} parent=35 // pred_fallthru
          _
        %224 = sfence
        %p225 = pneg %p51
        %p226 = pneg %p48
        %s227 = smul.u32 6, %s23
        %p228 = scmp.lt.s32.totalorder %s227, 17
        %s229 = scalar_select %p228, %s227, 17
        %s230 = smul.addr %s229, 4
        %s231 = scalar_lea.vmem %s1, %s230
        %p232 = pneg %p77
        %p233 = pneg %p74
        %p234 = scmp.lt.s32.totalorder %s21, 1
        %s235 = scalar_select %p234, %s21, 1
        %s236 = smul.addr %s235, 3
        %s237 = smul.addr %s236, 8
        %s238 = scalar_lea.vmem %s2, %s237
        %p239 = pneg %p103
        %p240 = pneg %p100
        %p241 = scmp.lt.s32.totalorder %s21, 1
        %s242 = scalar_select %p241, %s21, 1
        %s243 = smul.addr %s242, 4
        %s244 = scalar_lea.vmem %s3, %s243
        %p245 = pneg %p129
        %p246 = pneg %p126
        %p247 = pneg %p159
        %p248 = pneg %p156
        %s249 = smul.u32 %s23, %s22
        %s250 = smul.u32 6, %s249
        %p251 = scmp.lt.s32.totalorder %s21, 1
        %s252 = scalar_select %p251, %s21, 1
        %p253 = scmp.lt.s32.totalorder %s250, 17
        %s254 = scalar_select %p253, %s250, 17
        %s255 = smul.addr %s252, 18
        %s256 = sadd.s32 %s254, %s255
        %s257 = smul.addr %s256, 8
        %s258 = scalar_lea.vmem %s4, %s257
        %s259 = smul.u32 6, %s23
        %p260 = scmp.lt.s32.totalorder %s259, 17
        %s261 = scalar_select %p260, %s259, 17
        %s262 = smul.addr %s261, 4
        %s263 = scalar_lea.vmem %s1, %s262
        %s264 = smul.u32 6, %s23
        %p265 = scmp.lt.s32.totalorder %s21, 1
        %s266 = scalar_select %p265, %s21, 1
        %s267 = smul.addr %s266, 3
        %s268 = smul.addr %s267, 8
        %s269 = scalar_lea.vmem %s2, %s268
        %p270 = scmp.lt.s32.totalorder %s21, 1
        %s271 = scalar_select %p270, %s21, 1
        %s272 = smul.addr %s271, 4
        %s273 = scalar_lea.vmem %s3, %s272
        %s274 = smul.u32 %s23, %s22
        %s275 = smul.u32 6, %s274
        %p276 = scmp.lt.s32.totalorder %s21, 1
        %s277 = scalar_select %p276, %s21, 1
        %p278 = scmp.lt.s32.totalorder %s275, 17
        %s279 = scalar_select %p278, %s275, 17
        %s280 = smul.addr %s277, 18
        %s281 = sadd.s32 %s279, %s280
        %s282 = smul.addr %s281, 8
        %s283 = scalar_lea.vmem %s4, %s282
        %s284 = smul.u32 %s23, %s22
        %s285 = smul.u32 6, %s284
        %v286 = vld [vmem:[%s263] ss:$4 sm:$0x3f]
        %s287 = scalar_lea.vmem %s263, 1
        %v288 = vld [vmem:[%s287] ss:$4 sm:$0x3f]
        %s289 = scalar_lea.vmem %s263, 2
        %v290 = vld [vmem:[%s289] ss:$4 sm:$0x3f]
        %s291 = scalar_lea.vmem %s263, 3
        %v292 = vld [vmem:[%s291] ss:$4 sm:$0x3f]
        %s293 = sld [smem:[#allocation3]]
        %s294 = sld [smem:[#allocation3 + $0x1]]
        %vm295 = vcmp.ge.f32.partialorder %v286, 0.0
        %vm296 = vcmp.ge.f32.partialorder %v288, 0.0
        %vm297 = vmand %vm295, %vm296
        %v298 = vstv %s294
        %vm299 = vcmp.lt.f32.partialorder %v290, %v298
        %vm300 = vmand %vm297, %vm299
        %v301 = vstv %s293
        %vm302 = vcmp.lt.f32.partialorder %v292, %v301
        %vm303 = vmand %vm300, %vm302
        %v304 = vld [vmem:[%s269] sm:$0xff]
        %v305 = vld [vmem:[%s269 + $0x8] sm:$0xff]
        %v306 = vld [vmem:[%s269 + $0x10] sm:$0xf]
        %vm307 = vcmp.gt.f32.partialorder %v304, 0.5
        %vm308 = vcmp.gt.f32.partialorder %v305, 0.5
        %vm309 = vcmp.gt.f32.partialorder %v306, 0.5
        %v310 = vsub.f32 %v290, %v286
        %v311 = vadd.f32 %v310, 1.0
        %v312 = vsub.f32 %v292, %v288
        %v313 = vadd.f32 %v312, 1.0
        %v314 = vmul.f32 %v311, %v313
        %vm315 = vcmp.eq.f32.partialorder %v311, 1.0
        %vm316 = vcmp.eq.f32.partialorder %v313, 1.0
        %vm317 = vmand %vm315, %vm316
        %v319 = vlaneseq
        %v320 = vshrl.u32 %v319, 7
        %v321 = vsub.s32 0, %v320
        %v322 = vrot.slane %v290, %v321
        %v323 = vlaneseq
        %v324 = vshrl.u32 %v323, 7
        %v325 = vsub.s32 1, %v324
        %v326 = vrot.slane %v290, %v325
        %v327 = vlaneseq
        %v328 = vshrl.u32 %v327, 7
        %v329 = vsub.s32 2, %v328
        %v330 = vrot.slane %v290, %v329
        %v331 = vlaneseq
        %v332 = vshrl.u32 %v331, 7
        %v333 = vsub.s32 3, %v332
        %v334 = vrot.slane %v290, %v333
        %v335 = vlaneseq
        %v336 = vshrl.u32 %v335, 7
        %v337 = vsub.s32 4, %v336
        %v338 = vrot.slane %v290, %v337
        %v339 = vlaneseq
        %v340 = vshrl.u32 %v339, 7
        %v341 = vsub.s32 5, %v340
        %v342 = vrot.slane %v290, %v341
        %350 = vset.pattern.permute.xlu0 2
        %351 = vperm.xlu0 %350, %v304
        %v352 = vpop.permute.xlu0 %351
        %355 = vset.pattern.permute.xlu0 2
        %356 = vperm.xlu0 %355, %v305
        %v357 = vpop.permute.xlu0 %356
        %360 = vset.pattern.permute.xlu0 2
        %361 = vperm.xlu0 %360, %v306
        %v362 = vpop.permute.xlu0 %361
        %v364 = vmin.f32 %v322, %v352
        %v365 = vmin.f32 %v326, %v352
        %v366 = vmin.f32 %v330, %v352
        %v367 = vmin.f32 %v334, %v352
        %v368 = vmin.f32 %v338, %v352
        %v369 = vmin.f32 %v342, %v352
        %v370 = vmin.f32 %v322, %v357
        %v371 = vmin.f32 %v326, %v357
        %v372 = vmin.f32 %v330, %v357
        %v373 = vmin.f32 %v334, %v357
        %v374 = vmin.f32 %v338, %v357
        %v375 = vmin.f32 %v342, %v357
        %v376 = vmin.f32 %v322, %v362
        %v377 = vmin.f32 %v326, %v362
        %v378 = vmin.f32 %v330, %v362
        %v379 = vmin.f32 %v334, %v362
        %v380 = vmin.f32 %v338, %v362
        %v381 = vmin.f32 %v342, %v362
        %v383 = vlaneseq
        %v384 = vshrl.u32 %v383, 7
        %v385 = vsub.s32 0, %v384
        %v386 = vrot.slane %v286, %v385
        %v387 = vlaneseq
        %v388 = vshrl.u32 %v387, 7
        %v389 = vsub.s32 1, %v388
        %v390 = vrot.slane %v286, %v389
        %v391 = vlaneseq
        %v392 = vshrl.u32 %v391, 7
        %v393 = vsub.s32 2, %v392
        %v394 = vrot.slane %v286, %v393
        %v395 = vlaneseq
        %v396 = vshrl.u32 %v395, 7
        %v397 = vsub.s32 3, %v396
        %v398 = vrot.slane %v286, %v397
        %v399 = vlaneseq
        %v400 = vshrl.u32 %v399, 7
        %v401 = vsub.s32 4, %v400
        %v402 = vrot.slane %v286, %v401
        %v403 = vlaneseq
        %v404 = vshrl.u32 %v403, 7
        %v405 = vsub.s32 5, %v404
        %v406 = vrot.slane %v286, %v405
        %413 = vset.pattern.permute.xlu0 0
        %414 = vperm.xlu0 %413, %v304
        %v415 = vpop.permute.xlu0 %414
        %417 = vset.pattern.permute.xlu0 0
        %418 = vperm.xlu0 %417, %v305
        %v419 = vpop.permute.xlu0 %418
        %421 = vset.pattern.permute.xlu0 0
        %422 = vperm.xlu0 %421, %v306
        %v423 = vpop.permute.xlu0 %422
        %v425 = vmax.f32 %v386, %v415
        %v426 = vmax.f32 %v390, %v415
        %v427 = vmax.f32 %v394, %v415
        %v428 = vmax.f32 %v398, %v415
        %v429 = vmax.f32 %v402, %v415
        %v430 = vmax.f32 %v406, %v415
        %v431 = vmax.f32 %v386, %v419
        %v432 = vmax.f32 %v390, %v419
        %v433 = vmax.f32 %v394, %v419
        %v434 = vmax.f32 %v398, %v419
        %v435 = vmax.f32 %v402, %v419
        %v436 = vmax.f32 %v406, %v419
        %v437 = vmax.f32 %v386, %v423
        %v438 = vmax.f32 %v390, %v423
        %v439 = vmax.f32 %v394, %v423
        %v440 = vmax.f32 %v398, %v423
        %v441 = vmax.f32 %v402, %v423
        %v442 = vmax.f32 %v406, %v423
        %v443 = vsub.f32 %v364, %v425
        %v444 = vsub.f32 %v365, %v426
        %v445 = vsub.f32 %v366, %v427
        %v446 = vsub.f32 %v367, %v428
        %v447 = vsub.f32 %v368, %v429
        %v448 = vsub.f32 %v369, %v430
        %v449 = vsub.f32 %v370, %v431
        %v450 = vsub.f32 %v371, %v432
        %v451 = vsub.f32 %v372, %v433
        %v452 = vsub.f32 %v373, %v434
        %v453 = vsub.f32 %v374, %v435
        %v454 = vsub.f32 %v375, %v436
        %v455 = vsub.f32 %v376, %v437
        %v456 = vsub.f32 %v377, %v438
        %v457 = vsub.f32 %v378, %v439
        %v458 = vsub.f32 %v379, %v440
        %v459 = vsub.f32 %v380, %v441
        %v460 = vsub.f32 %v381, %v442
        %v461 = vadd.f32 %v443, 1.0
        %v462 = vadd.f32 %v444, 1.0
        %v463 = vadd.f32 %v445, 1.0
        %v464 = vadd.f32 %v446, 1.0
        %v465 = vadd.f32 %v447, 1.0
        %v466 = vadd.f32 %v448, 1.0
        %v467 = vadd.f32 %v449, 1.0
        %v468 = vadd.f32 %v450, 1.0
        %v469 = vadd.f32 %v451, 1.0
        %v470 = vadd.f32 %v452, 1.0
        %v471 = vadd.f32 %v453, 1.0
        %v472 = vadd.f32 %v454, 1.0
        %v473 = vadd.f32 %v455, 1.0
        %v474 = vadd.f32 %v456, 1.0
        %v475 = vadd.f32 %v457, 1.0
        %v476 = vadd.f32 %v458, 1.0
        %v477 = vadd.f32 %v459, 1.0
        %v478 = vadd.f32 %v460, 1.0
        %v479 = vmax.f32 %v461, 0.0
        %v480 = vmax.f32 %v462, 0.0
        %v481 = vmax.f32 %v463, 0.0
        %v482 = vmax.f32 %v464, 0.0
        %v483 = vmax.f32 %v465, 0.0
        %v484 = vmax.f32 %v466, 0.0
        %v485 = vmax.f32 %v467, 0.0
        %v486 = vmax.f32 %v468, 0.0
        %v487 = vmax.f32 %v469, 0.0
        %v488 = vmax.f32 %v470, 0.0
        %v489 = vmax.f32 %v471, 0.0
        %v490 = vmax.f32 %v472, 0.0
        %v491 = vmax.f32 %v473, 0.0
        %v492 = vmax.f32 %v474, 0.0
        %v493 = vmax.f32 %v475, 0.0
        %v494 = vmax.f32 %v476, 0.0
        %v495 = vmax.f32 %v477, 0.0
        %v496 = vmax.f32 %v478, 0.0
        %v498 = vlaneseq
        %v499 = vshrl.u32 %v498, 7
        %v500 = vsub.s32 0, %v499
        %v501 = vrot.slane %v292, %v500
        %v502 = vlaneseq
        %v503 = vshrl.u32 %v502, 7
        %v504 = vsub.s32 1, %v503
        %v505 = vrot.slane %v292, %v504
        %v506 = vlaneseq
        %v507 = vshrl.u32 %v506, 7
        %v508 = vsub.s32 2, %v507
        %v509 = vrot.slane %v292, %v508
        %v510 = vlaneseq
        %v511 = vshrl.u32 %v510, 7
        %v512 = vsub.s32 3, %v511
        %v513 = vrot.slane %v292, %v512
        %v514 = vlaneseq
        %v515 = vshrl.u32 %v514, 7
        %v516 = vsub.s32 4, %v515
        %v517 = vrot.slane %v292, %v516
        %v518 = vlaneseq
        %v519 = vshrl.u32 %v518, 7
        %v520 = vsub.s32 5, %v519
        %v521 = vrot.slane %v292, %v520
        %528 = vset.pattern.permute.xlu0 3
        %529 = vperm.xlu0 %528, %v304
        %v530 = vpop.permute.xlu0 %529
        %532 = vset.pattern.permute.xlu0 3
        %533 = vperm.xlu0 %532, %v305
        %v534 = vpop.permute.xlu0 %533
        %536 = vset.pattern.permute.xlu0 3
        %537 = vperm.xlu0 %536, %v306
        %v538 = vpop.permute.xlu0 %537
        %v540 = vmin.f32 %v501, %v530
        %v541 = vmin.f32 %v505, %v530
        %v542 = vmin.f32 %v509, %v530
        %v543 = vmin.f32 %v513, %v530
        %v544 = vmin.f32 %v517, %v530
        %v545 = vmin.f32 %v521, %v530
        %v546 = vmin.f32 %v501, %v534
        %v547 = vmin.f32 %v505, %v534
        %v548 = vmin.f32 %v509, %v534
        %v549 = vmin.f32 %v513, %v534
        %v550 = vmin.f32 %v517, %v534
        %v551 = vmin.f32 %v521, %v534
        %v552 = vmin.f32 %v501, %v538
        %v553 = vmin.f32 %v505, %v538
        %v554 = vmin.f32 %v509, %v538
        %v555 = vmin.f32 %v513, %v538
        %v556 = vmin.f32 %v517, %v538
        %v557 = vmin.f32 %v521, %v538
        %v559 = vlaneseq
        %v560 = vshrl.u32 %v559, 7
        %v561 = vsub.s32 0, %v560
        %v562 = vrot.slane %v288, %v561
        %v563 = vlaneseq
        %v564 = vshrl.u32 %v563, 7
        %v565 = vsub.s32 1, %v564
        %v566 = vrot.slane %v288, %v565
        %v567 = vlaneseq
        %v568 = vshrl.u32 %v567, 7
        %v569 = vsub.s32 2, %v568
        %v570 = vrot.slane %v288, %v569
        %v571 = vlaneseq
        %v572 = vshrl.u32 %v571, 7
        %v573 = vsub.s32 3, %v572
        %v574 = vrot.slane %v288, %v573
        %v575 = vlaneseq
        %v576 = vshrl.u32 %v575, 7
        %v577 = vsub.s32 4, %v576
        %v578 = vrot.slane %v288, %v577
        %v579 = vlaneseq
        %v580 = vshrl.u32 %v579, 7
        %v581 = vsub.s32 5, %v580
        %v582 = vrot.slane %v288, %v581
        %589 = vset.pattern.permute.xlu0 1
        %590 = vperm.xlu0 %589, %v304
        %v591 = vpop.permute.xlu0 %590
        %593 = vset.pattern.permute.xlu0 1
        %594 = vperm.xlu0 %593, %v305
        %v595 = vpop.permute.xlu0 %594
        %597 = vset.pattern.permute.xlu0 1
        %598 = vperm.xlu0 %597, %v306
        %v599 = vpop.permute.xlu0 %598
        %v601 = vmax.f32 %v562, %v591
        %v602 = vmax.f32 %v566, %v591
        %v603 = vmax.f32 %v570, %v591
        %v604 = vmax.f32 %v574, %v591
        %v605 = vmax.f32 %v578, %v591
        %v606 = vmax.f32 %v582, %v591
        %v607 = vmax.f32 %v562, %v595
        %v608 = vmax.f32 %v566, %v595
        %v609 = vmax.f32 %v570, %v595
        %v610 = vmax.f32 %v574, %v595
        %v611 = vmax.f32 %v578, %v595
        %v612 = vmax.f32 %v582, %v595
        %v613 = vmax.f32 %v562, %v599
        %v614 = vmax.f32 %v566, %v599
        %v615 = vmax.f32 %v570, %v599
        %v616 = vmax.f32 %v574, %v599
        %v617 = vmax.f32 %v578, %v599
        %v618 = vmax.f32 %v582, %v599
        %v619 = vsub.f32 %v540, %v601
        %v620 = vsub.f32 %v541, %v602
        %v621 = vsub.f32 %v542, %v603
        %v622 = vsub.f32 %v543, %v604
        %v623 = vsub.f32 %v544, %v605
        %v624 = vsub.f32 %v545, %v606
        %v625 = vsub.f32 %v546, %v607
        %v626 = vsub.f32 %v547, %v608
        %v627 = vsub.f32 %v548, %v609
        %v628 = vsub.f32 %v549, %v610
        %v629 = vsub.f32 %v550, %v611
        %v630 = vsub.f32 %v551, %v612
        %v631 = vsub.f32 %v552, %v613
        %v632 = vsub.f32 %v553, %v614
        %v633 = vsub.f32 %v554, %v615
        %v634 = vsub.f32 %v555, %v616
        %v635 = vsub.f32 %v556, %v617
        %v636 = vsub.f32 %v557, %v618
        %v637 = vadd.f32 %v619, 1.0
        %v638 = vadd.f32 %v620, 1.0
        %v639 = vadd.f32 %v621, 1.0
        %v640 = vadd.f32 %v622, 1.0
        %v641 = vadd.f32 %v623, 1.0
        %v642 = vadd.f32 %v624, 1.0
        %v643 = vadd.f32 %v625, 1.0
        %v644 = vadd.f32 %v626, 1.0
        %v645 = vadd.f32 %v627, 1.0
        %v646 = vadd.f32 %v628, 1.0
        %v647 = vadd.f32 %v629, 1.0
        %v648 = vadd.f32 %v630, 1.0
        %v649 = vadd.f32 %v631, 1.0
        %v650 = vadd.f32 %v632, 1.0
        %v651 = vadd.f32 %v633, 1.0
        %v652 = vadd.f32 %v634, 1.0
        %v653 = vadd.f32 %v635, 1.0
        %v654 = vadd.f32 %v636, 1.0
        %v655 = vmax.f32 %v637, 0.0
        %v656 = vmax.f32 %v638, 0.0
        %v657 = vmax.f32 %v639, 0.0
        %v658 = vmax.f32 %v640, 0.0
        %v659 = vmax.f32 %v641, 0.0
        %v660 = vmax.f32 %v642, 0.0
        %v661 = vmax.f32 %v643, 0.0
        %v662 = vmax.f32 %v644, 0.0
        %v663 = vmax.f32 %v645, 0.0
        %v664 = vmax.f32 %v646, 0.0
        %v665 = vmax.f32 %v647, 0.0
        %v666 = vmax.f32 %v648, 0.0
        %v667 = vmax.f32 %v649, 0.0
        %v668 = vmax.f32 %v650, 0.0
        %v669 = vmax.f32 %v651, 0.0
        %v670 = vmax.f32 %v652, 0.0
        %v671 = vmax.f32 %v653, 0.0
        %v672 = vmax.f32 %v654, 0.0
        %v673 = vmul.f32 %v479, %v655
        %v674 = vmul.f32 %v480, %v656
        %v675 = vmul.f32 %v481, %v657
        %v676 = vmul.f32 %v482, %v658
        %v677 = vmul.f32 %v483, %v659
        %v678 = vmul.f32 %v484, %v660
        %v679 = vmul.f32 %v485, %v661
        %v680 = vmul.f32 %v486, %v662
        %v681 = vmul.f32 %v487, %v663
        %v682 = vmul.f32 %v488, %v664
        %v683 = vmul.f32 %v489, %v665
        %v684 = vmul.f32 %v490, %v666
        %v685 = vmul.f32 %v491, %v667
        %v686 = vmul.f32 %v492, %v668
        %v687 = vmul.f32 %v493, %v669
        %v688 = vmul.f32 %v494, %v670
        %v689 = vmul.f32 %v495, %v671
        %v690 = vmul.f32 %v496, %v672
        %v692 = vlaneseq
        %v693 = vshrl.u32 %v692, 7
        %v694 = vsub.s32 0, %v693
        %v695 = vrot.slane %v314, %v694
        %v696 = vlaneseq
        %v697 = vshrl.u32 %v696, 7
        %v698 = vsub.s32 1, %v697
        %v699 = vrot.slane %v314, %v698
        %v700 = vlaneseq
        %v701 = vshrl.u32 %v700, 7
        %v702 = vsub.s32 2, %v701
        %v703 = vrot.slane %v314, %v702
        %v704 = vlaneseq
        %v705 = vshrl.u32 %v704, 7
        %v706 = vsub.s32 3, %v705
        %v707 = vrot.slane %v314, %v706
        %v708 = vlaneseq
        %v709 = vshrl.u32 %v708, 7
        %v710 = vsub.s32 4, %v709
        %v711 = vrot.slane %v314, %v710
        %v712 = vlaneseq
        %v713 = vshrl.u32 %v712, 7
        %v714 = vsub.s32 5, %v713
        %v715 = vrot.slane %v314, %v714
        %722 = vset.pattern.permute.xlu0 4
        %723 = vperm.xlu0 %722, %v304
        %v724 = vpop.permute.xlu0 %723
        %726 = vset.pattern.permute.xlu0 4
        %727 = vperm.xlu0 %726, %v305
        %v728 = vpop.permute.xlu0 %727
        %730 = vset.pattern.permute.xlu0 4
        %731 = vperm.xlu0 %730, %v306
        %v732 = vpop.permute.xlu0 %731
        %v734 = vadd.f32 %v695, %v724
        %v735 = vadd.f32 %v699, %v724
        %v736 = vadd.f32 %v703, %v724
        %v737 = vadd.f32 %v707, %v724
        %v738 = vadd.f32 %v711, %v724
        %v739 = vadd.f32 %v715, %v724
        %v740 = vadd.f32 %v695, %v728
        %v741 = vadd.f32 %v699, %v728
        %v742 = vadd.f32 %v703, %v728
        %v743 = vadd.f32 %v707, %v728
        %v744 = vadd.f32 %v711, %v728
        %v745 = vadd.f32 %v715, %v728
        %v746 = vadd.f32 %v695, %v732
        %v747 = vadd.f32 %v699, %v732
        %v748 = vadd.f32 %v703, %v732
        %v749 = vadd.f32 %v707, %v732
        %v750 = vadd.f32 %v711, %v732
        %v751 = vadd.f32 %v715, %v732
        %v752 = vsub.f32 %v734, %v673
        %v753 = vsub.f32 %v735, %v674
        %v754 = vsub.f32 %v736, %v675
        %v755 = vsub.f32 %v737, %v676
        %v756 = vsub.f32 %v738, %v677
        %v757 = vsub.f32 %v739, %v678
        %v758 = vsub.f32 %v740, %v679
        %v759 = vsub.f32 %v741, %v680
        %v760 = vsub.f32 %v742, %v681
        %v761 = vsub.f32 %v743, %v682
        %v762 = vsub.f32 %v744, %v683
        %v763 = vsub.f32 %v745, %v684
        %v764 = vsub.f32 %v746, %v685
        %v765 = vsub.f32 %v747, %v686
        %v766 = vsub.f32 %v748, %v687
        %v767 = vsub.f32 %v749, %v688
        %v768 = vsub.f32 %v750, %v689
        %v769 = vsub.f32 %v751, %v690
        %v770 = vrcp.pop %v752
        %v771 = vmul.f32 %v673, %v770
        %v772 = vrcp.pop %v753
        %v773 = vmul.f32 %v674, %v772
        %v774 = vrcp.pop %v754
        %v775 = vmul.f32 %v675, %v774
        %v776 = vrcp.pop %v755
        %v777 = vmul.f32 %v676, %v776
        %v778 = vrcp.pop %v756
        %v779 = vmul.f32 %v677, %v778
        %v780 = vrcp.pop %v757
        %v781 = vmul.f32 %v678, %v780
        %v782 = vrcp.pop %v758
        %v783 = vmul.f32 %v679, %v782
        %v784 = vrcp.pop %v759
        %v785 = vmul.f32 %v680, %v784
        %v786 = vrcp.pop %v760
        %v787 = vmul.f32 %v681, %v786
        %v788 = vrcp.pop %v761
        %v789 = vmul.f32 %v682, %v788
        %v790 = vrcp.pop %v762
        %v791 = vmul.f32 %v683, %v790
        %v792 = vrcp.pop %v763
        %v793 = vmul.f32 %v684, %v792
        %v794 = vrcp.pop %v764
        %v795 = vmul.f32 %v685, %v794
        %v796 = vrcp.pop %v765
        %v797 = vmul.f32 %v686, %v796
        %v798 = vrcp.pop %v766
        %v799 = vmul.f32 %v687, %v798
        %v800 = vrcp.pop %v767
        %v801 = vmul.f32 %v688, %v800
        %v802 = vrcp.pop %v768
        %v803 = vmul.f32 %v689, %v802
        %v804 = vrcp.pop %v769
        %v805 = vmul.f32 %v690, %v804
        %v806 = vsel %vm307, 1, 0
        %v807 = vsel %vm308, 1, 0
        %v808 = vsel %vm309, 1, 0
        %809 = vset.pattern.permute.xlu0 5
        %810 = vperm.xlu0 %809, %v806
        %v811 = vpop.permute.xlu0 %810
        %812 = vset.pattern.permute.xlu0 5
        %813 = vperm.xlu0 %812, %v807
        %v814 = vpop.permute.xlu0 %813
        %815 = vset.pattern.permute.xlu0 5
        %816 = vperm.xlu0 %815, %v808
        %v817 = vpop.permute.xlu0 %816
        %vm818 = vcmp.eq.s32.totalorder %v811, 1
        %vm819 = vcmp.eq.s32.totalorder %v814, 1
        %vm820 = vcmp.eq.s32.totalorder %v817, 1
        %v821 = vsel %vm818, 0.0, %v771
        %v822 = vsel %vm818, 0.0, %v773
        %v823 = vsel %vm818, 0.0, %v775
        %v824 = vsel %vm818, 0.0, %v777
        %v825 = vsel %vm818, 0.0, %v779
        %v826 = vsel %vm818, 0.0, %v781
        %v827 = vsel %vm819, 0.0, %v783
        %v828 = vsel %vm819, 0.0, %v785
        %v829 = vsel %vm819, 0.0, %v787
        %v830 = vsel %vm819, 0.0, %v789
        %v831 = vsel %vm819, 0.0, %v791
        %v832 = vsel %vm819, 0.0, %v793
        %v833 = vsel %vm820, 0.0, %v795
        %v834 = vsel %vm820, 0.0, %v797
        %v835 = vsel %vm820, 0.0, %v799
        %v836 = vsel %vm820, 0.0, %v801
        %v837 = vsel %vm820, 0.0, %v803
        %v838 = vsel %vm820, 0.0, %v805
        %v839 = vsel %vm317, 1, 0
        %v840 = vlaneseq
        %v841 = vshrl.u32 %v840, 7
        %v842 = vsub.s32 0, %v841
        %v843 = vrot.slane %v839, %v842
        %v844 = vlaneseq
        %v845 = vshrl.u32 %v844, 7
        %v846 = vsub.s32 1, %v845
        %v847 = vrot.slane %v839, %v846
        %v848 = vlaneseq
        %v849 = vshrl.u32 %v848, 7
        %v850 = vsub.s32 2, %v849
        %v851 = vrot.slane %v839, %v850
        %v852 = vlaneseq
        %v853 = vshrl.u32 %v852, 7
        %v854 = vsub.s32 3, %v853
        %v855 = vrot.slane %v839, %v854
        %v856 = vlaneseq
        %v857 = vshrl.u32 %v856, 7
        %v858 = vsub.s32 4, %v857
        %v859 = vrot.slane %v839, %v858
        %v860 = vlaneseq
        %v861 = vshrl.u32 %v860, 7
        %v862 = vsub.s32 5, %v861
        %v863 = vrot.slane %v839, %v862
        %vm864 = vcmp.eq.s32.totalorder %v843, 1
        %vm865 = vcmp.eq.s32.totalorder %v847, 1
        %vm866 = vcmp.eq.s32.totalorder %v851, 1
        %vm867 = vcmp.eq.s32.totalorder %v855, 1
        %vm868 = vcmp.eq.s32.totalorder %v859, 1
        %vm869 = vcmp.eq.s32.totalorder %v863, 1
        %v870 = vsel %vm864, -1.0, %v821
        %v871 = vsel %vm865, -1.0, %v822
        %v872 = vsel %vm866, -1.0, %v823
        %v873 = vsel %vm867, -1.0, %v824
        %v874 = vsel %vm868, -1.0, %v825
        %v875 = vsel %vm869, -1.0, %v826
        %v876 = vsel %vm864, -1.0, %v827
        %v877 = vsel %vm865, -1.0, %v828
        %v878 = vsel %vm866, -1.0, %v829
        %v879 = vsel %vm867, -1.0, %v830
        %v880 = vsel %vm868, -1.0, %v831
        %v881 = vsel %vm869, -1.0, %v832
        %v882 = vsel %vm864, -1.0, %v833
        %v883 = vsel %vm865, -1.0, %v834
        %v884 = vsel %vm866, -1.0, %v835
        %v885 = vsel %vm867, -1.0, %v836
        %v886 = vsel %vm868, -1.0, %v837
        %v887 = vsel %vm869, -1.0, %v838
        %v888 = vsel %vm303, 1, 0
        %v889 = vlaneseq
        %v890 = vshrl.u32 %v889, 7
        %v891 = vsub.s32 0, %v890
        %v892 = vrot.slane %v888, %v891
        %v893 = vlaneseq
        %v894 = vshrl.u32 %v893, 7
        %v895 = vsub.s32 1, %v894
        %v896 = vrot.slane %v888, %v895
        %v897 = vlaneseq
        %v898 = vshrl.u32 %v897, 7
        %v899 = vsub.s32 2, %v898
        %v900 = vrot.slane %v888, %v899
        %v901 = vlaneseq
        %v902 = vshrl.u32 %v901, 7
        %v903 = vsub.s32 3, %v902
        %v904 = vrot.slane %v888, %v903
        %v905 = vlaneseq
        %v906 = vshrl.u32 %v905, 7
        %v907 = vsub.s32 4, %v906
        %v908 = vrot.slane %v888, %v907
        %v909 = vlaneseq
        %v910 = vshrl.u32 %v909, 7
        %v911 = vsub.s32 5, %v910
        %v912 = vrot.slane %v888, %v911
        %vm913 = vcmp.eq.s32.totalorder %v892, 1
        %vm914 = vcmp.eq.s32.totalorder %v896, 1
        %vm915 = vcmp.eq.s32.totalorder %v900, 1
        %vm916 = vcmp.eq.s32.totalorder %v904, 1
        %vm917 = vcmp.eq.s32.totalorder %v908, 1
        %vm918 = vcmp.eq.s32.totalorder %v912, 1
        %v919 = vsel %vm913, %v870, -2.0
        %v920 = vsel %vm914, %v871, -2.0
        %v921 = vsel %vm915, %v872, -2.0
        %v922 = vsel %vm916, %v873, -2.0
        %v923 = vsel %vm917, %v874, -2.0
        %v924 = vsel %vm918, %v875, -2.0
        %v925 = vsel %vm913, %v876, -2.0
        %v926 = vsel %vm914, %v877, -2.0
        %v927 = vsel %vm915, %v878, -2.0
        %v928 = vsel %vm916, %v879, -2.0
        %v929 = vsel %vm917, %v880, -2.0
        %v930 = vsel %vm918, %v881, -2.0
        %v931 = vsel %vm913, %v882, -2.0
        %v932 = vsel %vm914, %v883, -2.0
        %v933 = vsel %vm915, %v884, -2.0
        %v934 = vsel %vm916, %v885, -2.0
        %v935 = vsel %vm917, %v886, -2.0
        %v936 = vsel %vm918, %v887, -2.0
        %p937 = scmp.eq.s32.totalorder %s22, 0
        %p938 = scmp.eq.s32.totalorder %s23, 0
        %p939 = pnand %p937, %p938
        %p940 = pneg %p939
        // Predicated region
        $region41: #{_forward_device.5} parent=35 // pred_check
          _
        $region42: #{_forward_device.5} parent=35 // pred_check_branch
          %942 = sbr.rel (%p939) target = $region44
        $region43: #{_forward_device.5} parent=35 // pred_region
          %vm943 = vcmask 7168
          %944 = vst.msk [vmem:[#allocation2] sm:$0xff] %vm943, -2.0
          %945 = vst.msk [vmem:[#allocation2 + $0x8] sm:$0xff] %vm943, -2.0
          %vm946 = vcmask 3072
          %947 = vst.msk [vmem:[#allocation2 + $0x10] sm:$0xf] %vm946, -2.0
        $region44: #{_forward_device.5} parent=35 // pred_fallthru
          _
        // Predicated region
        $region45: #{_forward_device.5} parent=35 // pred_check
          %p948 = pneg %p937
        $region46: #{_forward_device.5} parent=35 // pred_check_branch
          %950 = sbr.rel (%p948) target = $region48
        $region47: #{_forward_device.5} parent=35 // pred_region
          %v951 = vld [vmem:[#allocation2] sm:$0xff]
          %v952 = vld [vmem:[#allocation2 + $0x8] sm:$0xff]
          %v953 = vld [vmem:[#allocation2 + $0x10] sm:$0xf]
          %v954 = vmax.f32 %v919, %v921
          %v955 = vmax.f32 %v920, %v922
          %v956 = vmax.f32 %v954, %v923
          %v957 = vmax.f32 %v955, %v924
          %v958 = vmax.f32 %v956, %v957
          %959 = vmax.xlane.f32.xlu0 %v958
          %v960 = vpop.xlane.xlu0 %959
          %v961 = vmax.f32 %v925, %v927
          %v962 = vmax.f32 %v926, %v928
          %v963 = vmax.f32 %v961, %v929
          %v964 = vmax.f32 %v962, %v930
          %v965 = vmax.f32 %v963, %v964
          %966 = vmax.xlane.f32.xlu0 %v965
          %v967 = vpop.xlane.xlu0 %966
          %vm968 = vcmask 1043456
          %v969 = vsel %vm968, %v931, -inf
          %v970 = vsel %vm968, %v932, -inf
          %v971 = vsel %vm968, %v933, -inf
          %v972 = vmax.f32 %v969, %v971
          %v973 = vsel %vm968, %v934, -inf
          %v974 = vmax.f32 %v970, %v973
          %v975 = vsel %vm968, %v935, -inf
          %v976 = vmax.f32 %v972, %v975
          %v977 = vsel %vm968, %v936, -inf
          %v978 = vmax.f32 %v974, %v977
          %v979 = vmax.f32 %v976, %v978
          %980 = vmax.xlane.f32.xlu0 %v979
          %v981 = vpop.xlane.xlu0 %980
          %v982 = vmax.f32 %v951, %v960
          %v983 = vmax.f32 %v952, %v967
          %v984 = vmax.f32 %v953, %v981
          %vm985 = vcmask 7168
          %986 = vst.msk [vmem:[#allocation2] sm:$0xff] %vm985, %v982
          %987 = vst.msk [vmem:[#allocation2 + $0x8] sm:$0xff] %vm985, %v983
          %vm988 = vcmask 3072
          %989 = vst.msk [vmem:[#allocation2 + $0x10] sm:$0xf] %vm988, %v984
        $region48: #{_forward_device.5} parent=35 // pred_fallthru
          _
        %p990 = scmp.eq.s32.totalorder %s22, 1
        // Predicated region
        $region49: #{_forward_device.5} parent=35 // pred_check
          %p991 = pneg %p990
        $region50: #{_forward_device.5} parent=35 // pred_check_branch
          %993 = sbr.rel (%p991) target = $region52
        $region51: #{_forward_device.5} parent=35 // pred_region
          %v994 = vmax.f32 %v919, %v925
          %vm995 = vcmask 1043456
          %v996 = vsel %vm995, %v931, -inf
          %v997 = vmax.f32 %v994, %v996
          %v998 = vrot.slane %v997, 4
          %v999 = vmax.f32 %v997, %v998
          %v1000 = vrot.slane %v999, 2
          %v1001 = vmax.f32 %v999, %v1000
          %v1002 = vrot.slane %v1001, 1
          %v1003 = vmax.f32 %v1001, %v1002
          %v1004 = vmax.f32 %v920, %v926
          %v1005 = vsel %vm995, %v932, -inf
          %v1006 = vmax.f32 %v1004, %v1005
          %v1007 = vrot.slane %v1006, 4
          %v1008 = vmax.f32 %v1006, %v1007
          %v1009 = vrot.slane %v1008, 2
          %v1010 = vmax.f32 %v1008, %v1009
          %v1011 = vrot.slane %v1010, 1
          %v1012 = vmax.f32 %v1010, %v1011
          %v1013 = vmax.f32 %v921, %v927
          %v1014 = vsel %vm995, %v933, -inf
          %v1015 = vmax.f32 %v1013, %v1014
          %v1016 = vrot.slane %v1015, 4
          %v1017 = vmax.f32 %v1015, %v1016
          %v1018 = vrot.slane %v1017, 2
          %v1019 = vmax.f32 %v1017, %v1018
          %v1020 = vrot.slane %v1019, 1
          %v1021 = vmax.f32 %v1019, %v1020
          %v1022 = vmax.f32 %v922, %v928
          %v1023 = vsel %vm995, %v934, -inf
          %v1024 = vmax.f32 %v1022, %v1023
          %v1025 = vrot.slane %v1024, 4
          %v1026 = vmax.f32 %v1024, %v1025
          %v1027 = vrot.slane %v1026, 2
          %v1028 = vmax.f32 %v1026, %v1027
          %v1029 = vrot.slane %v1028, 1
          %v1030 = vmax.f32 %v1028, %v1029
          %v1031 = vmax.f32 %v923, %v929
          %v1032 = vsel %vm995, %v935, -inf
          %v1033 = vmax.f32 %v1031, %v1032
          %v1034 = vrot.slane %v1033, 4
          %v1035 = vmax.f32 %v1033, %v1034
          %v1036 = vrot.slane %v1035, 2
          %v1037 = vmax.f32 %v1035, %v1036
          %v1038 = vrot.slane %v1037, 1
          %v1039 = vmax.f32 %v1037, %v1038
          %v1040 = vmax.f32 %v924, %v930
          %v1041 = vsel %vm995, %v936, -inf
          %v1042 = vmax.f32 %v1040, %v1041
          %v1043 = vrot.slane %v1042, 4
          %v1044 = vmax.f32 %v1042, %v1043
          %v1045 = vrot.slane %v1044, 2
          %v1046 = vmax.f32 %v1044, %v1045
          %v1047 = vrot.slane %v1046, 1
          %v1048 = vmax.f32 %v1046, %v1047
          %v1049 = vlaneseq
          %v1050 = vshrl.u32 %v1049, 7
          %v1051 = vadd.s32 %v1050, 8
          %v1052 = vadd.s32 %v1050, 16
          %vm1053 = vcmp.eq.f32.partialorder %v919, %v1003
          %vm1054 = vcmp.eq.f32.partialorder %v920, %v1012
          %vm1055 = vcmp.eq.f32.partialorder %v921, %v1021
          %vm1056 = vcmp.eq.f32.partialorder %v922, %v1030
          %vm1057 = vcmp.eq.f32.partialorder %v923, %v1039
          %vm1058 = vcmp.eq.f32.partialorder %v924, %v1048
          %vm1059 = vcmp.eq.f32.partialorder %v925, %v1003
          %vm1060 = vcmp.eq.f32.partialorder %v926, %v1012
          %vm1061 = vcmp.eq.f32.partialorder %v927, %v1021
          %vm1062 = vcmp.eq.f32.partialorder %v928, %v1030
          %vm1063 = vcmp.eq.f32.partialorder %v929, %v1039
          %vm1064 = vcmp.eq.f32.partialorder %v930, %v1048
          %vm1065 = vcmp.eq.f32.partialorder %v931, %v1003
          %vm1066 = vcmp.eq.f32.partialorder %v932, %v1012
          %vm1067 = vcmp.eq.f32.partialorder %v933, %v1021
          %vm1068 = vcmp.eq.f32.partialorder %v934, %v1030
          %vm1069 = vcmp.eq.f32.partialorder %v935, %v1039
          %vm1070 = vcmp.eq.f32.partialorder %v936, %v1048
          %v1071 = vsel %vm1053, %v1050, 20
          %v1072 = vsel %vm1054, %v1050, 20
          %v1073 = vsel %vm1055, %v1050, 20
          %v1074 = vsel %vm1056, %v1050, 20
          %v1075 = vsel %vm1057, %v1050, 20
          %v1076 = vsel %vm1058, %v1050, 20
          %v1077 = vsel %vm1059, %v1051, 20
          %v1078 = vsel %vm1060, %v1051, 20
          %v1079 = vsel %vm1061, %v1051, 20
          %v1080 = vsel %vm1062, %v1051, 20
          %v1081 = vsel %vm1063, %v1051, 20
          %v1082 = vsel %vm1064, %v1051, 20
          %v1083 = vsel %vm1065, %v1052, 20
          %v1084 = vsel %vm1066, %v1052, 20
          %v1085 = vsel %vm1067, %v1052, 20
          %v1086 = vsel %vm1068, %v1052, 20
          %v1087 = vsel %vm1069, %v1052, 20
          %v1088 = vsel %vm1070, %v1052, 20
          %vm1089 = vcmp.lt.s32.totalorder %v1071, %v1077
          %v1090 = vsel %vm1089, %v1071, %v1077
          %v1091 = vsel %vm995, %v1083, 2147483647
          %vm1092 = vcmp.lt.s32.totalorder %v1090, %v1091
          %v1093 = vsel %vm1092, %v1090, %v1091
          %v1094 = vrot.slane %v1093, 4
          %vm1095 = vcmp.lt.s32.totalorder %v1093, %v1094
          %v1096 = vsel %vm1095, %v1093, %v1094
          %v1097 = vrot.slane %v1096, 2
          %vm1098 = vcmp.lt.s32.totalorder %v1096, %v1097
          %v1099 = vsel %vm1098, %v1096, %v1097
          %v1100 = vrot.slane %v1099, 1
          %vm1101 = vcmp.lt.s32.totalorder %v1099, %v1100
          %v1102 = vsel %vm1101, %v1099, %v1100
          %vm1103 = vcmp.lt.s32.totalorder %v1072, %v1078
          %v1104 = vsel %vm1103, %v1072, %v1078
          %v1105 = vsel %vm995, %v1084, 2147483647
          %vm1106 = vcmp.lt.s32.totalorder %v1104, %v1105
          %v1107 = vsel %vm1106, %v1104, %v1105
          %v1108 = vrot.slane %v1107, 4
          %vm1109 = vcmp.lt.s32.totalorder %v1107, %v1108
          %v1110 = vsel %vm1109, %v1107, %v1108
          %v1111 = vrot.slane %v1110, 2
          %vm1112 = vcmp.lt.s32.totalorder %v1110, %v1111
          %v1113 = vsel %vm1112, %v1110, %v1111
          %v1114 = vrot.slane %v1113, 1
          %vm1115 = vcmp.lt.s32.totalorder %v1113, %v1114
          %v1116 = vsel %vm1115, %v1113, %v1114
          %vm1117 = vcmp.lt.s32.totalorder %v1073, %v1079
          %v1118 = vsel %vm1117, %v1073, %v1079
          %v1119 = vsel %vm995, %v1085, 2147483647
          %vm1120 = vcmp.lt.s32.totalorder %v1118, %v1119
          %v1121 = vsel %vm1120, %v1118, %v1119
          %v1122 = vrot.slane %v1121, 4
          %vm1123 = vcmp.lt.s32.totalorder %v1121, %v1122
          %v1124 = vsel %vm1123, %v1121, %v1122
          %v1125 = vrot.slane %v1124, 2
          %vm1126 = vcmp.lt.s32.totalorder %v1124, %v1125
          %v1127 = vsel %vm1126, %v1124, %v1125
          %v1128 = vrot.slane %v1127, 1
          %vm1129 = vcmp.lt.s32.totalorder %v1127, %v1128
          %v1130 = vsel %vm1129, %v1127, %v1128
          %vm1131 = vcmp.lt.s32.totalorder %v1074, %v1080
          %v1132 = vsel %vm1131, %v1074, %v1080
          %v1133 = vsel %vm995, %v1086, 2147483647
          %vm1134 = vcmp.lt.s32.totalorder %v1132, %v1133
          %v1135 = vsel %vm1134, %v1132, %v1133
          %v1136 = vrot.slane %v1135, 4
          %vm1137 = vcmp.lt.s32.totalorder %v1135, %v1136
          %v1138 = vsel %vm1137, %v1135, %v1136
          %v1139 = vrot.slane %v1138, 2
          %vm1140 = vcmp.lt.s32.totalorder %v1138, %v1139
          %v1141 = vsel %vm1140, %v1138, %v1139
          %v1142 = vrot.slane %v1141, 1
          %vm1143 = vcmp.lt.s32.totalorder %v1141, %v1142
          %v1144 = vsel %vm1143, %v1141, %v1142
          %vm1145 = vcmp.lt.s32.totalorder %v1075, %v1081
          %v1146 = vsel %vm1145, %v1075, %v1081
          %v1147 = vsel %vm995, %v1087, 2147483647
          %vm1148 = vcmp.lt.s32.totalorder %v1146, %v1147
          %v1149 = vsel %vm1148, %v1146, %v1147
          %v1150 = vrot.slane %v1149, 4
          %vm1151 = vcmp.lt.s32.totalorder %v1149, %v1150
          %v1152 = vsel %vm1151, %v1149, %v1150
          %v1153 = vrot.slane %v1152, 2
          %vm1154 = vcmp.lt.s32.totalorder %v1152, %v1153
          %v1155 = vsel %vm1154, %v1152, %v1153
          %v1156 = vrot.slane %v1155, 1
          %vm1157 = vcmp.lt.s32.totalorder %v1155, %v1156
          %v1158 = vsel %vm1157, %v1155, %v1156
          %vm1159 = vcmp.lt.s32.totalorder %v1076, %v1082
          %v1160 = vsel %vm1159, %v1076, %v1082
          %v1161 = vsel %vm995, %v1088, 2147483647
          %vm1162 = vcmp.lt.s32.totalorder %v1160, %v1161
          %v1163 = vsel %vm1162, %v1160, %v1161
          %v1164 = vrot.slane %v1163, 4
          %vm1165 = vcmp.lt.s32.totalorder %v1163, %v1164
          %v1166 = vsel %vm1165, %v1163, %v1164
          %v1167 = vrot.slane %v1166, 2
          %vm1168 = vcmp.lt.s32.totalorder %v1166, %v1167
          %v1169 = vsel %vm1168, %v1166, %v1167
          %v1170 = vrot.slane %v1169, 1
          %vm1171 = vcmp.lt.s32.totalorder %v1169, %v1170
          %v1172 = vsel %vm1171, %v1169, %v1170
          %v1173 = vld [vmem:[#allocation2] sm:$0xff]
          %v1174 = vld [vmem:[#allocation2 + $0x8] sm:$0xff]
          %v1175 = vld [vmem:[#allocation2 + $0x10] sm:$0xf]
          %vm1176 = vcmp.eq.f32.partialorder %v1173, 0.0
          %vm1177 = vcmp.eq.f32.partialorder %v1174, 0.0
          %vm1178 = vcmp.eq.f32.partialorder %v1175, 0.0
          %v1179 = vsel %vm1176, 1e-05, %v1173
          %v1180 = vsel %vm1177, 1e-05, %v1174
          %v1181 = vsel %vm1178, 1e-05, %v1175
          %1183 = vset.pattern.permute.xlu0 0
          %1184 = vperm.xlu0 %1183, %v1179
          %v1185 = vpop.permute.xlu0 %1184
          %1188 = vset.pattern.permute.xlu0 0
          %1189 = vperm.xlu0 %1188, %v1180
          %v1190 = vpop.permute.xlu0 %1189
          %1193 = vset.pattern.permute.xlu0 0
          %1194 = vperm.xlu0 %1193, %v1181
          %v1195 = vpop.permute.xlu0 %1194
          %vm1197 = vcmp.eq.f32.partialorder %v919, %v1185
          %vm1198 = vcmp.eq.f32.partialorder %v920, %v1185
          %vm1199 = vcmp.eq.f32.partialorder %v921, %v1185
          %vm1200 = vcmp.eq.f32.partialorder %v922, %v1185
          %vm1201 = vcmp.eq.f32.partialorder %v923, %v1185
          %vm1202 = vcmp.eq.f32.partialorder %v924, %v1185
          %vm1203 = vcmp.eq.f32.partialorder %v925, %v1190
          %vm1204 = vcmp.eq.f32.partialorder %v926, %v1190
          %vm1205 = vcmp.eq.f32.partialorder %v927, %v1190
          %vm1206 = vcmp.eq.f32.partialorder %v928, %v1190
          %vm1207 = vcmp.eq.f32.partialorder %v929, %v1190
          %vm1208 = vcmp.eq.f32.partialorder %v930, %v1190
          %vm1209 = vcmp.eq.f32.partialorder %v931, %v1195
          %vm1210 = vcmp.eq.f32.partialorder %v932, %v1195
          %vm1211 = vcmp.eq.f32.partialorder %v933, %v1195
          %vm1212 = vcmp.eq.f32.partialorder %v934, %v1195
          %vm1213 = vcmp.eq.f32.partialorder %v935, %v1195
          %vm1214 = vcmp.eq.f32.partialorder %v936, %v1195
          %v1215 = vsel %vm1197, 1.0, 0.0
          %v1216 = vsel %vm1198, 1.0, 0.0
          %v1217 = vsel %vm1199, 1.0, 0.0
          %v1218 = vsel %vm1200, 1.0, 0.0
          %v1219 = vsel %vm1201, 1.0, 0.0
          %v1220 = vsel %vm1202, 1.0, 0.0
          %v1221 = vsel %vm1203, 1.0, 0.0
          %v1222 = vsel %vm1204, 1.0, 0.0
          %v1223 = vsel %vm1205, 1.0, 0.0
          %v1224 = vsel %vm1206, 1.0, 0.0
          %v1225 = vsel %vm1207, 1.0, 0.0
          %v1226 = vsel %vm1208, 1.0, 0.0
          %v1227 = vsel %vm1209, 1.0, 0.0
          %v1228 = vsel %vm1210, 1.0, 0.0
          %v1229 = vsel %vm1211, 1.0, 0.0
          %v1230 = vsel %vm1212, 1.0, 0.0
          %v1231 = vsel %vm1213, 1.0, 0.0
          %v1232 = vsel %vm1214, 1.0, 0.0
          %v1233 = vmax.f32 %v1215, %v1221
          %v1234 = vsel %vm995, %v1227, -inf
          %v1235 = vmax.f32 %v1233, %v1234
          %v1236 = vrot.slane %v1235, 4
          %v1237 = vmax.f32 %v1235, %v1236
          %v1238 = vrot.slane %v1237, 2
          %v1239 = vmax.f32 %v1237, %v1238
          %v1240 = vrot.slane %v1239, 1
          %v1241 = vmax.f32 %v1239, %v1240
          %v1242 = vmax.f32 %v1216, %v1222
          %v1243 = vsel %vm995, %v1228, -inf
          %v1244 = vmax.f32 %v1242, %v1243
          %v1245 = vrot.slane %v1244, 4
          %v1246 = vmax.f32 %v1244, %v1245
          %v1247 = vrot.slane %v1246, 2
          %v1248 = vmax.f32 %v1246, %v1247
          %v1249 = vrot.slane %v1248, 1
          %v1250 = vmax.f32 %v1248, %v1249
          %v1251 = vmax.f32 %v1217, %v1223
          %v1252 = vsel %vm995, %v1229, -inf
          %v1253 = vmax.f32 %v1251, %v1252
          %v1254 = vrot.slane %v1253, 4
          %v1255 = vmax.f32 %v1253, %v1254
          %v1256 = vrot.slane %v1255, 2
          %v1257 = vmax.f32 %v1255, %v1256
          %v1258 = vrot.slane %v1257, 1
          %v1259 = vmax.f32 %v1257, %v1258
          %v1260 = vmax.f32 %v1218, %v1224
          %v1261 = vsel %vm995, %v1230, -inf
          %v1262 = vmax.f32 %v1260, %v1261
          %v1263 = vrot.slane %v1262, 4
          %v1264 = vmax.f32 %v1262, %v1263
          %v1265 = vrot.slane %v1264, 2
          %v1266 = vmax.f32 %v1264, %v1265
          %v1267 = vrot.slane %v1266, 1
          %v1268 = vmax.f32 %v1266, %v1267
          %v1269 = vmax.f32 %v1219, %v1225
          %v1270 = vsel %vm995, %v1231, -inf
          %v1271 = vmax.f32 %v1269, %v1270
          %v1272 = vrot.slane %v1271, 4
          %v1273 = vmax.f32 %v1271, %v1272
          %v1274 = vrot.slane %v1273, 2
          %v1275 = vmax.f32 %v1273, %v1274
          %v1276 = vrot.slane %v1275, 1
          %v1277 = vmax.f32 %v1275, %v1276
          %v1278 = vmax.f32 %v1220, %v1226
          %v1279 = vsel %vm995, %v1232, -inf
          %v1280 = vmax.f32 %v1278, %v1279
          %v1281 = vrot.slane %v1280, 4
          %v1282 = vmax.f32 %v1280, %v1281
          %v1283 = vrot.slane %v1282, 2
          %v1284 = vmax.f32 %v1282, %v1283
          %v1285 = vrot.slane %v1284, 1
          %v1286 = vmax.f32 %v1284, %v1285
          %vm1287 = vcmp.gt.f32.partialorder %v1241, 0.0
          %vm1288 = vcmp.gt.f32.partialorder %v1250, 0.0
          %vm1289 = vcmp.gt.f32.partialorder %v1259, 0.0
          %vm1290 = vcmp.gt.f32.partialorder %v1268, 0.0
          %vm1291 = vcmp.gt.f32.partialorder %v1277, 0.0
          %vm1292 = vcmp.gt.f32.partialorder %v1286, 0.0
          %vm1293 = vcmp.lt.f32.partialorder %v1003, 0.3
          %vm1294 = vcmp.lt.f32.partialorder %v1012, 0.3
          %vm1295 = vcmp.lt.f32.partialorder %v1021, 0.3
          %vm1296 = vcmp.lt.f32.partialorder %v1030, 0.3
          %vm1297 = vcmp.lt.f32.partialorder %v1039, 0.3
          %vm1298 = vcmp.lt.f32.partialorder %v1048, 0.3
          %v1299 = vsel %vm1293, 1, 0
          %v1300 = vsel %vm1294, 1, 0
          %v1301 = vsel %vm1295, 1, 0
          %v1302 = vsel %vm1296, 1, 0
          %v1303 = vsel %vm1297, 1, 0
          %v1304 = vsel %vm1298, 1, 0
          %v1305 = vcombine.low %v1299, %v1300
          %v1306 = vcombine.low %v1301, %v1302
          %v1307 = vcombine.low %v1303, %v1304
          %v1309 = vunpack.c.l.s4 1966171168
          %v1310 = vunpack.c.0.s8 %v1309
          %v1311 = vlaneseq
          %v1312 = vshrl.u32 %v1311, 7
          %v1313 = vsub.s32 %v1310, %v1312
          %v1314 = vrot.slane %v1305, %v1313
          %v1316 = vunpack.c.l.s4 1966171168
          %v1317 = vunpack.c.0.s8 %v1316
          %v1318 = vlaneseq
          %v1319 = vshrl.u32 %v1318, 7
          %v1320 = vsub.s32 %v1317, %v1319
          %v1321 = vrot.slane %v1306, %v1320
          %v1323 = vunpack.c.l.s4 1966171168
          %v1324 = vunpack.c.0.s8 %v1323
          %v1325 = vlaneseq
          %v1326 = vshrl.u32 %v1325, 7
          %v1327 = vsub.s32 %v1324, %v1326
          %v1328 = vrot.slane %v1307, %v1327
          %v1329 = vcombine.low %v1314, %v1321
          %v1331 = vunpack.c.l.s4 1966171168
          %v1332 = vunpack.c.0.s8 %v1331
          %v1333 = vlaneseq
          %v1334 = vshrl.u32 %v1333, 7
          %v1335 = vsub.s32 %v1332, %v1334
          %v1336 = vrot.slane %v1329, %v1335
          %v1338 = vunpack.c.l.s4 1966171168
          %v1339 = vunpack.c.0.s8 %v1338
          %v1340 = vlaneseq
          %v1341 = vshrl.u32 %v1340, 7
          %v1342 = vsub.s32 %v1339, %v1341
          %v1343 = vrot.slane %v1328, %v1342
          %v1344 = vcombine.low %v1336, %v1343
          %vm1345 = vcmp.ne.s32.totalorder %v1344, 0
          %vm1346 = vmand %vm303, %vm1345
          %v1347 = vsel %vm1346, 0.0, -1.0
          %v1348 = vsel %vm1287, 1, 0
          %v1349 = vsel %vm1288, 1, 0
          %v1350 = vsel %vm1289, 1, 0
          %v1351 = vsel %vm1290, 1, 0
          %v1352 = vsel %vm1291, 1, 0
          %v1353 = vsel %vm1292, 1, 0
          %v1354 = vcombine.low %v1348, %v1349
          %v1355 = vcombine.low %v1350, %v1351
          %v1356 = vcombine.low %v1352, %v1353
          %v1358 = vunpack.c.l.s4 1966171168
          %v1359 = vunpack.c.0.s8 %v1358
          %v1360 = vlaneseq
          %v1361 = vshrl.u32 %v1360, 7
          %v1362 = vsub.s32 %v1359, %v1361
          %v1363 = vrot.slane %v1354, %v1362
          %v1365 = vunpack.c.l.s4 1966171168
          %v1366 = vunpack.c.0.s8 %v1365
          %v1367 = vlaneseq
          %v1368 = vshrl.u32 %v1367, 7
          %v1369 = vsub.s32 %v1366, %v1368
          %v1370 = vrot.slane %v1355, %v1369
          %v1372 = vunpack.c.l.s4 1966171168
          %v1373 = vunpack.c.0.s8 %v1372
          %v1374 = vlaneseq
          %v1375 = vshrl.u32 %v1374, 7
          %v1376 = vsub.s32 %v1373, %v1375
          %v1377 = vrot.slane %v1356, %v1376
          %v1378 = vcombine.low %v1363, %v1370
          %v1380 = vunpack.c.l.s4 1966171168
          %v1381 = vunpack.c.0.s8 %v1380
          %v1382 = vlaneseq
          %v1383 = vshrl.u32 %v1382, 7
          %v1384 = vsub.s32 %v1381, %v1383
          %v1385 = vrot.slane %v1378, %v1384
          %v1387 = vunpack.c.l.s4 1966171168
          %v1388 = vunpack.c.0.s8 %v1387
          %v1389 = vlaneseq
          %v1390 = vshrl.u32 %v1389, 7
          %v1391 = vsub.s32 %v1388, %v1390
          %v1392 = vrot.slane %v1377, %v1391
          %v1393 = vcombine.low %v1385, %v1392
          %vm1394 = vcmp.ne.s32.totalorder %v1393, 0
          %vm1395 = vmand %vm303, %vm1394
          %v1396 = vsel %vm1395, 1.0, %v1347
          %vm1397 = vcmp.ge.f32.partialorder %v1003, 0.7
          %vm1398 = vcmp.ge.f32.partialorder %v1012, 0.7
          %vm1399 = vcmp.ge.f32.partialorder %v1021, 0.7
          %vm1400 = vcmp.ge.f32.partialorder %v1030, 0.7
          %vm1401 = vcmp.ge.f32.partialorder %v1039, 0.7
          %vm1402 = vcmp.ge.f32.partialorder %v1048, 0.7
          %v1403 = vsel %vm1397, 1, 0
          %v1404 = vsel %vm1398, 1, 0
          %v1405 = vsel %vm1399, 1, 0
          %v1406 = vsel %vm1400, 1, 0
          %v1407 = vsel %vm1401, 1, 0
          %v1408 = vsel %vm1402, 1, 0
          %v1409 = vcombine.low %v1403, %v1404
          %v1410 = vcombine.low %v1405, %v1406
          %v1411 = vcombine.low %v1407, %v1408
          %v1413 = vunpack.c.l.s4 1966171168
          %v1414 = vunpack.c.0.s8 %v1413
          %v1415 = vlaneseq
          %v1416 = vshrl.u32 %v1415, 7
          %v1417 = vsub.s32 %v1414, %v1416
          %v1418 = vrot.slane %v1409, %v1417
          %v1420 = vunpack.c.l.s4 1966171168
          %v1421 = vunpack.c.0.s8 %v1420
          %v1422 = vlaneseq
          %v1423 = vshrl.u32 %v1422, 7
          %v1424 = vsub.s32 %v1421, %v1423
          %v1425 = vrot.slane %v1410, %v1424
          %v1427 = vunpack.c.l.s4 1966171168
          %v1428 = vunpack.c.0.s8 %v1427
          %v1429 = vlaneseq
          %v1430 = vshrl.u32 %v1429, 7
          %v1431 = vsub.s32 %v1428, %v1430
          %v1432 = vrot.slane %v1411, %v1431
          %v1433 = vcombine.low %v1418, %v1425
          %v1435 = vunpack.c.l.s4 1966171168
          %v1436 = vunpack.c.0.s8 %v1435
          %v1437 = vlaneseq
          %v1438 = vshrl.u32 %v1437, 7
          %v1439 = vsub.s32 %v1436, %v1438
          %v1440 = vrot.slane %v1433, %v1439
          %v1442 = vunpack.c.l.s4 1966171168
          %v1443 = vunpack.c.0.s8 %v1442
          %v1444 = vlaneseq
          %v1445 = vshrl.u32 %v1444, 7
          %v1446 = vsub.s32 %v1443, %v1445
          %v1447 = vrot.slane %v1432, %v1446
          %v1448 = vcombine.low %v1440, %v1447
          %vm1449 = vcmp.ne.s32.totalorder %v1448, 0
          %vm1450 = vmand %vm303, %vm1449
          %v1451 = vsel %vm1450, 1.0, %v1396
          %vm1452 = vcmp.eq.s32.totalorder %v1050, %v1102
          %vm1453 = vcmp.eq.s32.totalorder %v1050, %v1116
          %vm1454 = vcmp.eq.s32.totalorder %v1050, %v1130
          %vm1455 = vcmp.eq.s32.totalorder %v1050, %v1144
          %vm1456 = vcmp.eq.s32.totalorder %v1050, %v1158
          %vm1457 = vcmp.eq.s32.totalorder %v1050, %v1172
          %vm1458 = vcmp.eq.s32.totalorder %v1051, %v1102
          %vm1459 = vcmp.eq.s32.totalorder %v1051, %v1116
          %vm1460 = vcmp.eq.s32.totalorder %v1051, %v1130
          %vm1461 = vcmp.eq.s32.totalorder %v1051, %v1144
          %vm1462 = vcmp.eq.s32.totalorder %v1051, %v1158
          %vm1463 = vcmp.eq.s32.totalorder %v1051, %v1172
          %vm1464 = vcmp.eq.s32.totalorder %v1052, %v1102
          %vm1465 = vcmp.eq.s32.totalorder %v1052, %v1116
          %vm1466 = vcmp.eq.s32.totalorder %v1052, %v1130
          %vm1467 = vcmp.eq.s32.totalorder %v1052, %v1144
          %vm1468 = vcmp.eq.s32.totalorder %v1052, %v1158
          %vm1469 = vcmp.eq.s32.totalorder %v1052, %v1172
          %v1470 = vsel %vm1452, 1, 0
          %v1471 = vsel %vm1453, 1, 0
          %v1472 = vsel %vm1454, 1, 0
          %v1473 = vsel %vm1455, 1, 0
          %v1474 = vsel %vm1456, 1, 0
          %v1475 = vsel %vm1457, 1, 0
          %v1476 = vsel %vm1458, 1, 0
          %v1477 = vsel %vm1459, 1, 0
          %v1478 = vsel %vm1460, 1, 0
          %v1479 = vsel %vm1461, 1, 0
          %v1480 = vsel %vm1462, 1, 0
          %v1481 = vsel %vm1463, 1, 0
          %v1482 = vsel %vm1464, 1, 0
          %v1483 = vsel %vm1465, 1, 0
          %v1484 = vsel %vm1466, 1, 0
          %v1485 = vsel %vm1467, 1, 0
          %v1486 = vsel %vm1468, 1, 0
          %v1487 = vsel %vm1469, 1, 0
          %v1488 = vcvt.s32.f32 %v1470
          %v1489 = vcvt.s32.f32 %v1471
          %v1490 = vcvt.s32.f32 %v1472
          %v1491 = vcvt.s32.f32 %v1473
          %v1492 = vcvt.s32.f32 %v1474
          %v1493 = vcvt.s32.f32 %v1475
          %v1494 = vcvt.s32.f32 %v1476
          %v1495 = vcvt.s32.f32 %v1477
          %v1496 = vcvt.s32.f32 %v1478
          %v1497 = vcvt.s32.f32 %v1479
          %v1498 = vcvt.s32.f32 %v1480
          %v1499 = vcvt.s32.f32 %v1481
          %v1500 = vcvt.s32.f32 %v1482
          %v1501 = vcvt.s32.f32 %v1483
          %v1502 = vcvt.s32.f32 %v1484
          %v1503 = vcvt.s32.f32 %v1485
          %v1504 = vcvt.s32.f32 %v1486
          %v1505 = vcvt.s32.f32 %v1487
          %v1506 = vld [vmem:[%s273] sm:$0xf]
          %vm1507 = vcmask 162816
          %v1509 = vsel %vm1507, %v1506, 0
          %v1512 = vsel %vm995, %v1500, 0
          %v1515 = vsel %vm995, %v1501, 0
          %v1518 = vsel %vm995, %v1502, 0
          %v1521 = vsel %vm995, %v1503, 0
          %v1524 = vsel %vm995, %v1504, 0
          %v1527 = vsel %vm995, %v1505, 0
          %1529 = vmatprep.subr.mxu0 %v1489
          %1530 = vmatpush1.msra.mxu0 %v1488
          %1531 = vmatprep.subr.mxu0 %v1495
          %1532 = vmatpush1.msra.mxu0 %v1494
          %1533 = vmatprep.subr.mxu0 %v1515
          %1534 = vmatpush1.msra.mxu0 %v1512
          %1535 = vmatprep.subr.mxu0 0.0
          %1536 = vmatpush1.msra.mxu0 0.0
          %1537 = vmatprep.subr.mxu0 0.0
          %1538 = vmatpush1.msra.mxu0 0.0
          %1539 = vmatprep.subr.mxu0 0.0
          %1540 = vmatpush1.msra.mxu0 0.0
          %1541 = vmatprep.subr.mxu0 0.0
          %1542 = vmatpush1.msra.mxu0 0.0
          %1543 = vmatprep.subr.mxu0 0.0
          %1544 = vmatpush1.msra.mxu0 0.0
          %1545 = vmatprep.subr.mxu0 0.0
          %1546 = vmatpush1.msra.mxu0 0.0
          %1547 = vmatprep.subr.mxu0 0.0
          %1548 = vmatpush1.msra.mxu0 0.0
          %1549 = vmatprep.subr.mxu0 0.0
          %1550 = vmatpush1.msra.mxu0 0.0
          %1551 = vmatprep.subr.mxu0 0.0
          %1552 = vmatpush1.msra.mxu0 0.0
          %1553 = vmatprep.subr.mxu0 0.0
          %1554 = vmatpush1.msra.mxu0 0.0
          %1555 = vmatprep.subr.mxu0 0.0
          %1556 = vmatpush1.msra.mxu0 0.0
          %1557 = vmatprep.subr.mxu0 0.0
          %1558 = vmatpush1.msra.mxu0 0.0
          %1559 = vmatprep.subr.mxu0 0.0
          %1560 = vmatpush1.msra.mxu0 0.0
          %1561 = vmatprep.subr.mxu0 0.0
          %1562 = vmatpush1.msra.mxu0 0.0
          %1563 = vmatprep.subr.mxu0 0.0
          %1564 = vmatpush1.msra.mxu0 0.0
          %1565 = vmatprep.subr.mxu0 0.0
          %1566 = vmatpush1.msra.mxu0 0.0
          %1567 = vmatprep.subr.mxu0 0.0
          %1568 = vmatpush1.msra.mxu0 0.0
          %1569 = vmatprep.subr.mxu0 0.0
          %1570 = vmatpush1.msra.mxu0 0.0
          %1571 = vmatprep.subr.mxu0 0.0
          %1572 = vmatpush1.msra.mxu0 0.0
          %1573 = vmatprep.subr.mxu0 0.0
          %1574 = vmatpush1.msra.mxu0 0.0
          %1575 = vmatprep.subr.mxu0 0.0
          %1576 = vmatpush1.msra.mxu0 0.0
          %1577 = vmatprep.subr.mxu0 0.0
          %1578 = vmatpush1.msra.mxu0 0.0
          %1579 = vmatprep.subr.mxu0 0.0
          %1580 = vmatpush1.msra.mxu0 0.0
          %1581 = vmatprep.subr.mxu0 0.0
          %1582 = vmatpush1.msra.mxu0 0.0
          %1583 = vmatprep.subr.mxu0 0.0
          %1584 = vmatpush1.msra.mxu0 0.0
          %1585 = vmatprep.subr.mxu0 0.0
          %1586 = vmatpush1.msra.mxu0 0.0
          %1587 = vmatprep.subr.mxu0 0.0
          %1588 = vmatpush1.msra.mxu0 0.0
          %1589 = vmatprep.subr.mxu0 0.0
          %1590 = vmatpush1.msra.mxu0 0.0
          %1591 = vmatprep.subr.mxu0 0.0
          %1592 = vmatpush1.msra.mxu0 0.0
          %1593 = vmatprep.mubr.f32.mxu0 0.0
          %1594 = vmatmul.mubr.f32.gmra.mrb[0].mxu0 %v1509
          %v1595 = vpop.f32.mrb[0].mxu0
          %v1596 = vadd.f32 0.0, %v1595
          %v1597 = vpop.f32.mrb[0].mxu0
          %v1598 = vadd.f32 0.0, %v1597
          %1599 = vdwg.mxu0
          %1600 = vmatprep.subr.mxu0 %v1491
          %1601 = vmatpush1.msra.mxu0 %v1490
          %1602 = vmatprep.subr.mxu0 %v1497
          %1603 = vmatpush1.msra.mxu0 %v1496
          %1604 = vmatprep.subr.mxu0 %v1521
          %1605 = vmatpush1.msra.mxu0 %v1518
          %1606 = vmatprep.subr.mxu0 0.0
          %1607 = vmatpush1.msra.mxu0 0.0
          %1608 = vmatprep.subr.mxu0 0.0
          %1609 = vmatpush1.msra.mxu0 0.0
          %1610 = vmatprep.subr.mxu0 0.0
          %1611 = vmatpush1.msra.mxu0 0.0
          %1612 = vmatprep.subr.mxu0 0.0
          %1613 = vmatpush1.msra.mxu0 0.0
          %1614 = vmatprep.subr.mxu0 0.0
          %1615 = vmatpush1.msra.mxu0 0.0
          %1616 = vmatprep.subr.mxu0 0.0
          %1617 = vmatpush1.msra.mxu0 0.0
          %1618 = vmatprep.subr.mxu0 0.0
          %1619 = vmatpush1.msra.mxu0 0.0
          %1620 = vmatprep.subr.mxu0 0.0
          %1621 = vmatpush1.msra.mxu0 0.0
          %1622 = vmatprep.subr.mxu0 0.0
          %1623 = vmatpush1.msra.mxu0 0.0
          %1624 = vmatprep.subr.mxu0 0.0
          %1625 = vmatpush1.msra.mxu0 0.0
          %1626 = vmatprep.subr.mxu0 0.0
          %1627 = vmatpush1.msra.mxu0 0.0
          %1628 = vmatprep.subr.mxu0 0.0
          %1629 = vmatpush1.msra.mxu0 0.0
          %1630 = vmatprep.subr.mxu0 0.0
          %1631 = vmatpush1.msra.mxu0 0.0
          %1632 = vmatprep.subr.mxu0 0.0
          %1633 = vmatpush1.msra.mxu0 0.0
          %1634 = vmatprep.subr.mxu0 0.0
          %1635 = vmatpush1.msra.mxu0 0.0
          %1636 = vmatprep.subr.mxu0 0.0
          %1637 = vmatpush1.msra.mxu0 0.0
          %1638 = vmatprep.subr.mxu0 0.0
          %1639 = vmatpush1.msra.mxu0 0.0
          %1640 = vmatprep.subr.mxu0 0.0
          %1641 = vmatpush1.msra.mxu0 0.0
          %1642 = vmatprep.subr.mxu0 0.0
          %1643 = vmatpush1.msra.mxu0 0.0
          %1644 = vmatprep.subr.mxu0 0.0
          %1645 = vmatpush1.msra.mxu0 0.0
          %1646 = vmatprep.subr.mxu0 0.0
          %1647 = vmatpush1.msra.mxu0 0.0
          %1648 = vmatprep.subr.mxu0 0.0
          %1649 = vmatpush1.msra.mxu0 0.0
          %1650 = vmatprep.subr.mxu0 0.0
          %1651 = vmatpush1.msra.mxu0 0.0
          %1652 = vmatprep.subr.mxu0 0.0
          %1653 = vmatpush1.msra.mxu0 0.0
          %1654 = vmatprep.subr.mxu0 0.0
          %1655 = vmatpush1.msra.mxu0 0.0
          %1656 = vmatprep.subr.mxu0 0.0
          %1657 = vmatpush1.msra.mxu0 0.0
          %1658 = vmatprep.subr.mxu0 0.0
          %1659 = vmatpush1.msra.mxu0 0.0
          %1660 = vmatprep.subr.mxu0 0.0
          %1661 = vmatpush1.msra.mxu0 0.0
          %1662 = vmatprep.subr.mxu0 0.0
          %1663 = vmatpush1.msra.mxu0 0.0
          %1664 = vmatprep.mubr.f32.mxu0 0.0
          %1665 = vmatmul.mubr.f32.gmra.mrb[0].mxu0 %v1509
          %v1666 = vpop.f32.mrb[0].mxu0
          %v1667 = vadd.f32 0.0, %v1666
          %v1668 = vpop.f32.mrb[0].mxu0
          %v1669 = vadd.f32 0.0, %v1668
          %1670 = vdwg.mxu0
          %1671 = vmatprep.subr.mxu0 %v1493
          %1672 = vmatpush1.msra.mxu0 %v1492
          %1673 = vmatprep.subr.mxu0 %v1499
          %1674 = vmatpush1.msra.mxu0 %v1498
          %1675 = vmatprep.subr.mxu0 %v1527
          %1676 = vmatpush1.msra.mxu0 %v1524
          %1677 = vmatprep.subr.mxu0 0.0
          %1678 = vmatpush1.msra.mxu0 0.0
          %1679 = vmatprep.subr.mxu0 0.0
          %1680 = vmatpush1.msra.mxu0 0.0
          %1681 = vmatprep.subr.mxu0 0.0
          %1682 = vmatpush1.msra.mxu0 0.0
          %1683 = vmatprep.subr.mxu0 0.0
          %1684 = vmatpush1.msra.mxu0 0.0
          %1685 = vmatprep.subr.mxu0 0.0
          %1686 = vmatpush1.msra.mxu0 0.0
          %1687 = vmatprep.subr.mxu0 0.0
          %1688 = vmatpush1.msra.mxu0 0.0
          %1689 = vmatprep.subr.mxu0 0.0
          %1690 = vmatpush1.msra.mxu0 0.0
          %1691 = vmatprep.subr.mxu0 0.0
          %1692 = vmatpush1.msra.mxu0 0.0
          %1693 = vmatprep.subr.mxu0 0.0
          %1694 = vmatpush1.msra.mxu0 0.0
          %1695 = vmatprep.subr.mxu0 0.0
          %1696 = vmatpush1.msra.mxu0 0.0
          %1697 = vmatprep.subr.mxu0 0.0
          %1698 = vmatpush1.msra.mxu0 0.0
          %1699 = vmatprep.subr.mxu0 0.0
          %1700 = vmatpush1.msra.mxu0 0.0
          %1701 = vmatprep.subr.mxu0 0.0
          %1702 = vmatpush1.msra.mxu0 0.0
          %1703 = vmatprep.subr.mxu0 0.0
          %1704 = vmatpush1.msra.mxu0 0.0
          %1705 = vmatprep.subr.mxu0 0.0
          %1706 = vmatpush1.msra.mxu0 0.0
          %1707 = vmatprep.subr.mxu0 0.0
          %1708 = vmatpush1.msra.mxu0 0.0
          %1709 = vmatprep.subr.mxu0 0.0
          %1710 = vmatpush1.msra.mxu0 0.0
          %1711 = vmatprep.subr.mxu0 0.0
          %1712 = vmatpush1.msra.mxu0 0.0
          %1713 = vmatprep.subr.mxu0 0.0
          %1714 = vmatpush1.msra.mxu0 0.0
          %1715 = vmatprep.subr.mxu0 0.0
          %1716 = vmatpush1.msra.mxu0 0.0
          %1717 = vmatprep.subr.mxu0 0.0
          %1718 = vmatpush1.msra.mxu0 0.0
          %1719 = vmatprep.subr.mxu0 0.0
          %1720 = vmatpush1.msra.mxu0 0.0
          %1721 = vmatprep.subr.mxu0 0.0
          %1722 = vmatpush1.msra.mxu0 0.0
          %1723 = vmatprep.subr.mxu0 0.0
          %1724 = vmatpush1.msra.mxu0 0.0
          %1725 = vmatprep.subr.mxu0 0.0
          %1726 = vmatpush1.msra.mxu0 0.0
          %1727 = vmatprep.subr.mxu0 0.0
          %1728 = vmatpush1.msra.mxu0 0.0
          %1729 = vmatprep.subr.mxu0 0.0
          %1730 = vmatpush1.msra.mxu0 0.0
          %1731 = vmatprep.subr.mxu0 0.0
          %1732 = vmatpush1.msra.mxu0 0.0
          %1733 = vmatprep.subr.mxu0 0.0
          %1734 = vmatpush1.msra.mxu0 0.0
          %1735 = vmatprep.mubr.f32.mxu0 0.0
          %1736 = vmatmul.mubr.f32.gmra.mrb[0].mxu0 %v1509
          %v1737 = vpop.f32.mrb[0].mxu0
          %v1738 = vadd.f32 0.0, %v1737
          %v1739 = vpop.f32.mrb[0].mxu0
          %v1740 = vadd.f32 0.0, %v1739
          %1741 = vdwg.mxu0
          %v1742 = vmul.f32 %v311, 0.5
          %v1743 = vadd.f32 %v286, %v1742
          %v1744 = vmul.f32 %v313, 0.5
          %v1745 = vadd.f32 %v288, %v1744
          %v1747 = vlaneseq
          %v1748 = vshrl.u32 %v1747, 7
          %v1749 = vsub.s32 0, %v1748
          %v1750 = vrot.slane %v1743, %v1749
          %v1751 = vlaneseq
          %v1752 = vshrl.u32 %v1751, 7
          %v1753 = vsub.s32 1, %v1752
          %v1754 = vrot.slane %v1743, %v1753
          %v1755 = vlaneseq
          %v1756 = vshrl.u32 %v1755, 7
          %v1757 = vsub.s32 2, %v1756
          %v1758 = vrot.slane %v1743, %v1757
          %v1759 = vlaneseq
          %v1760 = vshrl.u32 %v1759, 7
          %v1761 = vsub.s32 3, %v1760
          %v1762 = vrot.slane %v1743, %v1761
          %v1763 = vlaneseq
          %v1764 = vshrl.u32 %v1763, 7
          %v1765 = vsub.s32 4, %v1764
          %v1766 = vrot.slane %v1743, %v1765
          %v1767 = vlaneseq
          %v1768 = vshrl.u32 %v1767, 7
          %v1769 = vsub.s32 5, %v1768
          %v1770 = vrot.slane %v1743, %v1769
          %v1777 = vsub.f32 %v1596, %v1750
          %v1778 = vsub.f32 %v1598, %v1754
          %v1779 = vsub.f32 %v1667, %v1758
          %v1780 = vsub.f32 %v1669, %v1762
          %v1781 = vsub.f32 %v1738, %v1766
          %v1782 = vsub.f32 %v1740, %v1770
          %v1784 = vlaneseq
          %v1785 = vshrl.u32 %v1784, 7
          %v1786 = vsub.s32 0, %v1785
          %v1787 = vrot.slane %v311, %v1786
          %v1788 = vlaneseq
          %v1789 = vshrl.u32 %v1788, 7
          %v1790 = vsub.s32 1, %v1789
          %v1791 = vrot.slane %v311, %v1790
          %v1792 = vlaneseq
          %v1793 = vshrl.u32 %v1792, 7
          %v1794 = vsub.s32 2, %v1793
          %v1795 = vrot.slane %v311, %v1794
          %v1796 = vlaneseq
          %v1797 = vshrl.u32 %v1796, 7
          %v1798 = vsub.s32 3, %v1797
          %v1799 = vrot.slane %v311, %v1798
          %v1800 = vlaneseq
          %v1801 = vshrl.u32 %v1800, 7
          %v1802 = vsub.s32 4, %v1801
          %v1803 = vrot.slane %v311, %v1802
          %v1804 = vlaneseq
          %v1805 = vshrl.u32 %v1804, 7
          %v1806 = vsub.s32 5, %v1805
          %v1807 = vrot.slane %v311, %v1806
          %v1814 = vrcp.pop %v1787
          %v1815 = vmul.f32 %v1777, %v1814
          %v1816 = vrcp.pop %v1791
          %v1817 = vmul.f32 %v1778, %v1816
          %v1818 = vrcp.pop %v1795
          %v1819 = vmul.f32 %v1779, %v1818
          %v1820 = vrcp.pop %v1799
          %v1821 = vmul.f32 %v1780, %v1820
          %v1822 = vrcp.pop %v1803
          %v1823 = vmul.f32 %v1781, %v1822
          %v1824 = vrcp.pop %v1807
          %v1825 = vmul.f32 %v1782, %v1824
          %v1827 = vlaneseq
          %v1828 = vshrl.u32 %v1827, 7
          %v1829 = vsub.s32 0, %v1828
          %v1830 = vrot.slane %v1745, %v1829
          %v1831 = vlaneseq
          %v1832 = vshrl.u32 %v1831, 7
          %v1833 = vsub.s32 1, %v1832
          %v1834 = vrot.slane %v1745, %v1833
          %v1835 = vlaneseq
          %v1836 = vshrl.u32 %v1835, 7
          %v1837 = vsub.s32 2, %v1836
          %v1838 = vrot.slane %v1745, %v1837
          %v1839 = vlaneseq
          %v1840 = vshrl.u32 %v1839, 7
          %v1841 = vsub.s32 3, %v1840
          %v1842 = vrot.slane %v1745, %v1841
          %v1843 = vlaneseq
          %v1844 = vshrl.u32 %v1843, 7
          %v1845 = vsub.s32 4, %v1844
          %v1846 = vrot.slane %v1745, %v1845
          %v1847 = vlaneseq
          %v1848 = vshrl.u32 %v1847, 7
          %v1849 = vsub.s32 5, %v1848
          %v1850 = vrot.slane %v1745, %v1849
          %v1857 = vsub.f32 %v1596, %v1830
          %v1858 = vsub.f32 %v1598, %v1834
          %v1859 = vsub.f32 %v1667, %v1838
          %v1860 = vsub.f32 %v1669, %v1842
          %v1861 = vsub.f32 %v1738, %v1846
          %v1862 = vsub.f32 %v1740, %v1850
          %v1864 = vlaneseq
          %v1865 = vshrl.u32 %v1864, 7
          %v1866 = vsub.s32 0, %v1865
          %v1867 = vrot.slane %v313, %v1866
          %v1868 = vlaneseq
          %v1869 = vshrl.u32 %v1868, 7
          %v1870 = vsub.s32 1, %v1869
          %v1871 = vrot.slane %v313, %v1870
          %v1872 = vlaneseq
          %v1873 = vshrl.u32 %v1872, 7
          %v1874 = vsub.s32 2, %v1873
          %v1875 = vrot.slane %v313, %v1874
          %v1876 = vlaneseq
          %v1877 = vshrl.u32 %v1876, 7
          %v1878 = vsub.s32 3, %v1877
          %v1879 = vrot.slane %v313, %v1878
          %v1880 = vlaneseq
          %v1881 = vshrl.u32 %v1880, 7
          %v1882 = vsub.s32 4, %v1881
          %v1883 = vrot.slane %v313, %v1882
          %v1884 = vlaneseq
          %v1885 = vshrl.u32 %v1884, 7
          %v1886 = vsub.s32 5, %v1885
          %v1887 = vrot.slane %v313, %v1886
          %v1894 = vrcp.pop %v1867
          %v1895 = vmul.f32 %v1857, %v1894
          %v1896 = vrcp.pop %v1871
          %v1897 = vmul.f32 %v1858, %v1896
          %v1898 = vrcp.pop %v1875
          %v1899 = vmul.f32 %v1859, %v1898
          %v1900 = vrcp.pop %v1879
          %v1901 = vmul.f32 %v1860, %v1900
          %v1902 = vrcp.pop %v1883
          %v1903 = vmul.f32 %v1861, %v1902
          %v1904 = vrcp.pop %v1887
          %v1905 = vmul.f32 %v1862, %v1904
          %v1906 = vmul.f32 %v1596, %v1814
          %v1907 = vmul.f32 %v1598, %v1816
          %v1908 = vmul.f32 %v1667, %v1818
          %v1909 = vmul.f32 %v1669, %v1820
          %v1910 = vmul.f32 %v1738, %v1822
          %v1911 = vmul.f32 %v1740, %v1824
          %v1912 = vlog2.pop %v1906
          %v1913 = vmul.f32 %v1912, 0.6931472
          %v1914 = vlog2.pop %v1907
          %v1915 = vmul.f32 %v1914, 0.6931472
          %v1916 = vlog2.pop %v1908
          %v1917 = vmul.f32 %v1916, 0.6931472
          %v1918 = vlog2.pop %v1909
          %v1919 = vmul.f32 %v1918, 0.6931472
          %v1920 = vlog2.pop %v1910
          %v1921 = vmul.f32 %v1920, 0.6931472
          %v1922 = vlog2.pop %v1911
          %v1923 = vmul.f32 %v1922, 0.6931472
          %v1924 = vmul.f32 %v1596, %v1894
          %v1925 = vmul.f32 %v1598, %v1896
          %v1926 = vmul.f32 %v1667, %v1898
          %v1927 = vmul.f32 %v1669, %v1900
          %v1928 = vmul.f32 %v1738, %v1902
          %v1929 = vmul.f32 %v1740, %v1904
          %v1930 = vlog2.pop %v1924
          %v1931 = vmul.f32 %v1930, 0.6931472
          %v1932 = vlog2.pop %v1925
          %v1933 = vmul.f32 %v1932, 0.6931472
          %v1934 = vlog2.pop %v1926
          %v1935 = vmul.f32 %v1934, 0.6931472
          %v1936 = vlog2.pop %v1927
          %v1937 = vmul.f32 %v1936, 0.6931472
          %v1938 = vlog2.pop %v1928
          %v1939 = vmul.f32 %v1938, 0.6931472
          %v1940 = vlog2.pop %v1929
          %v1941 = vmul.f32 %v1940, 0.6931472
          %vm1942 = vcmask 1040384
          %v1943 = vsel %vm1942, %v1815, %v1895
          %v1944 = vsel %vm1942, %v1817, %v1897
          %v1945 = vsel %vm1942, %v1819, %v1899
          %v1946 = vsel %vm1942, %v1821, %v1901
          %v1947 = vsel %vm1942, %v1823, %v1903
          %v1948 = vsel %vm1942, %v1825, %v1905
          %vm1949 = vcmask 1041408
          %v1950 = vsel %vm1949, %v1943, %v1913
          %v1951 = vsel %vm1949, %v1944, %v1915
          %v1952 = vsel %vm1949, %v1945, %v1917
          %v1953 = vsel %vm1949, %v1946, %v1919
          %v1954 = vsel %vm1949, %v1947, %v1921
          %v1955 = vsel %vm1949, %v1948, %v1923
          %vm1956 = vcmask 1042432
          %v1957 = vsel %vm1956, %v1950, %v1931
          %v1958 = vsel %vm1956, %v1951, %v1933
          %v1959 = vsel %vm1956, %v1952, %v1935
          %v1960 = vsel %vm1956, %v1953, %v1937
          %v1961 = vsel %vm1956, %v1954, %v1939
          %v1962 = vsel %vm1956, %v1955, %v1941
          %v1963 = vsel %vm913, %v1957, 0.0
          %v1964 = vsel %vm914, %v1958, 0.0
          %v1965 = vsel %vm915, %v1959, 0.0
          %v1966 = vsel %vm916, %v1960, 0.0
          %v1967 = vsel %vm917, %v1961, 0.0
          %v1968 = vsel %vm918, %v1962, 0.0
          %v1970 = vlaneseq
          %v1971 = vshrl.u32 %v1970, 7
          %v1972 = vsub.s32 0, %v1971
          %v1973 = vrot.slane %v1451, %v1972
          %v1974 = vlaneseq
          %v1975 = vshrl.u32 %v1974, 7
          %v1976 = vsub.s32 1, %v1975
          %v1977 = vrot.slane %v1451, %v1976
          %v1978 = vlaneseq
          %v1979 = vshrl.u32 %v1978, 7
          %v1980 = vsub.s32 2, %v1979
          %v1981 = vrot.slane %v1451, %v1980
          %v1982 = vlaneseq
          %v1983 = vshrl.u32 %v1982, 7
          %v1984 = vsub.s32 3, %v1983
          %v1985 = vrot.slane %v1451, %v1984
          %v1986 = vlaneseq
          %v1987 = vshrl.u32 %v1986, 7
          %v1988 = vsub.s32 4, %v1987
          %v1989 = vrot.slane %v1451, %v1988
          %v1990 = vlaneseq
          %v1991 = vshrl.u32 %v1990, 7
          %v1992 = vsub.s32 5, %v1991
          %v1993 = vrot.slane %v1451, %v1992
          %v2000 = vsel %vm995, %v1963, %v1973
          %v2001 = vsel %vm995, %v1964, %v1977
          %v2002 = vsel %vm995, %v1965, %v1981
          %v2003 = vsel %vm995, %v1966, %v1985
          %v2004 = vsel %vm995, %v1967, %v1989
          %v2005 = vsel %vm995, %v1968, %v1993
          %vm2006 = vcmask 1044480
          %v2007 = vsel %vm2006, %v2000, 0.0
          %v2008 = vsel %vm2006, %v2001, 0.0
          %v2009 = vsel %vm2006, %v2002, 0.0
          %v2010 = vsel %vm2006, %v2003, 0.0
          %v2011 = vsel %vm2006, %v2004, 0.0
          %v2012 = vsel %vm2006, %v2005, 0.0
          %2013 = vst [vmem:[%s283] sm:$0xff] %v2007
          %2014 = vst [vmem:[%s283 + $0x8] sm:$0xff] %v2008
          %2015 = vst [vmem:[%s283 + $0x10] sm:$0xff] %v2009
          %2016 = vst [vmem:[%s283 + $0x18] sm:$0xff] %v2010
          %2017 = vst [vmem:[%s283 + $0x20] sm:$0xff] %v2011
          %2018 = vst [vmem:[%s283 + $0x28] sm:$0xff] %v2012
        $region52: #{_forward_device.5} parent=35 // pred_fallthru
          _
        %s2019 = smul.u32 %s23, %s22
        %s2020 = smul.u32 6, %s2019
        %p2021 = scmp.lt.s32.totalorder %s21, 1
        %s2022 = scalar_select %p2021, %s21, 1
        %p2023 = scmp.lt.s32.totalorder %s2020, 17
        %s2024 = scalar_select %p2023, %s2020, 17
        %s2025 = smul.addr %s2022, 18
        %s2026 = sadd.s32 %s2024, %s2025
        %s2027 = smul.addr %s2026, 8
        %s2028 = scalar_lea.vmem %s4, %s2027
        // Predicated region
        $region53: #{_forward_device.5} parent=35 // pred_check
          %p2029 = pneg %p156
        $region54: #{_forward_device.5} parent=35 // pred_check_branch
          %2031 = sbr.rel (%p2029) target = $region56
        $region55: #{_forward_device.5} parent=35 // pred_region
          %s2032 = smul.u32 %s23, %s22
          %s2033 = smul.u32 6, %s2032
        $region56: #{_forward_device.5} parent=35 // pred_fallthru
          _
      $region36: #{_forward_device.5} parent=5 // pred_fallthru
        _
      %p2034 = scmp.le.s32.totalorder 2, %s11
      // Predicated region
      $region57: #{_forward_device.5} parent=5 // pred_check
        %p2035 = pneg %p2034
      $region58: #{_forward_device.5} parent=5 // pred_check_branch
        %2037 = sbr.rel (%p2035) target = $region60
      $region59: #{_forward_device.5} parent=5 // pred_region
        %s2038 = ssub.s32 %s11, 2
        // Predicated region
        $region61: #{_forward_device.5} parent=59 // pred_check
          %p2039 = pneg %p162
        $region62: #{_forward_device.5} parent=59 // pred_check_branch
          %2041 = sbr.rel (%p2039) target = $region64
        $region63: #{_forward_device.5} parent=59 // pred_region
          %s2042 = smul.u32 %s26, %s25
          %s2043 = smul.u32 6, %s2042
          %p2044 = scmp.lt.s32.totalorder %s24, 1
          %s2045 = scalar_select %p2044, %s24, 1
          %p2046 = scmp.lt.s32.totalorder %s2043, 17
          %s2047 = scalar_select %p2046, %s2043, 17
          %s2048 = smul.addr %s2045, 18
          %s2049 = sadd.s32 %s2047, %s2048
          %s2050 = smul.addr %s2049, 8
          %s2051 = scalar_lea.vmem %s4, %s2050
        $region64: #{_forward_device.5} parent=59 // pred_fallthru
          _
      $region60: #{_forward_device.5} parent=5 // pred_fallthru
        _
    $region6: #{_forward_device.5} parent=1 // loop_footer
      %s15 = sadd.s32 1, %s11
    $region7: #{_forward_device.5} parent=1 // loop_footer_branch
      %10 = sbr.rel target = $region3
    $region8: #{_forward_device.5} parent=1 // loop_exit
      _
    %2052 = vsyncpa [#allocation4], 1
    %s2053 = scalar_lea.sflag [#allocation4], 1
    %2054 = vsyncpa %s2053, 1

</llo_original>
